<compile_context>
chip_gen: v5e
topology: v5e:2x2
jax: 0.10.0
libtpu: 0.0.40
codegen_flags: <defaults>
</compile_context>

<pallas_src>
import functools
import math

import jax
import jax.numpy as jnp
from jax.experimental import pallas as pl
from jax.experimental.pallas import tpu as pltpu

LN_EPS = 1e-5  # PyTorch nn.LayerNorm default eps


def _layernorm(x, w, b):
    mu = jnp.mean(x, axis=-1, keepdims=True)
    var = jnp.mean((x - mu) ** 2, axis=-1, keepdims=True)
    return (x - mu) * jax.lax.rsqrt(var + LN_EPS) * w + b


def encoder_block_kernel(x_ref, mask_ref,
                         ln1_w_ref, ln1_b_ref,
                         wqkv_ref, bqkv_ref, wo_ref, bo_ref,
                         ln2_w_ref, ln2_b_ref,
                         w1_ref, b1_ref, w2_ref, b2_ref,
                         o_ref, *, num_heads, approx_recip):
    f32 = jnp.float32
    x = x_ref[0].astype(f32)            # (S, E)
    mask = mask_ref[0]                  # (1, S) float: 1 = attend, 0 = pad
    S, E = x.shape
    H = num_heads
    Dh = E // H
    cdt = wqkv_ref.dtype                # MXU operand dtype (bf16 by default)

    # ---------------- MSA block (pre-LN self-attention) ----------------
    xn = _layernorm(x, ln1_w_ref[...], ln1_b_ref[...])

    # Single full-width QKV matmul: (S,E)@(E,3E), f32 accumulation, f32 bias add.
    # Column layout: [q_h0 | .. | q_h{H-1} | k_h0 | .. | k_h{H-1} | v_h0 | .. ],
    # with the 1/sqrt(Dh) attention scale already folded into the Q columns.
    qkv = jnp.dot(xn.astype(cdt), wqkv_ref[...],
                  preferred_element_type=f32) + bqkv_ref[...]               # (S, 3E) f32
    qkvc = qkv.astype(cdt)

    # Head split: static lane slices stacked along a new (major) head axis.
    def split_heads(col0):
        return jnp.stack(
            [qkvc[:, col0 + h * Dh: col0 + (h + 1) * Dh] for h in range(H)], axis=0)

    q = split_heads(0)          # (H, S, Dh), pre-scaled by 1/sqrt(Dh)
    k = split_heads(E)          # (H, S, Dh)
    v = split_heads(2 * E)      # (H, S, Dh)

    # key_padding_mask = (attention_mask == 0) -> additive -inf-like bias over keys.
    neg = jnp.where(mask == 0.0, f32(-1e30), f32(0.0))                      # (1, S)

    # All-head scores / softmax / context; MXU calls accumulate in f32.
    s = jnp.einsum('hqd,hkd->hqk', q, k, preferred_element_type=f32) + neg  # (H, S, S)

    m = jnp.max(s, axis=-1, keepdims=True)
    p = jnp.exp(s - m)
    l = jnp.sum(p, axis=-1, keepdims=True)
    # EUP reciprocal instead of an (S,S)-wide divide.  approx=True on the bf16 path
    # means softmax rows sum to 1 +/- ~2^-12 relative error.
    p = p * pl.reciprocal(l, approx=approx_recip)

    ctx = jnp.einsum('hqk,hkd->hqd', p.astype(cdt), v,
                     preferred_element_type=f32)                            # (H, S, Dh)

    # Merge heads back onto lanes and run ONE (S,E)@(E,E) out-projection (full MXU K).
    ctxc = ctx.astype(cdt)
    ctx2 = jnp.concatenate([ctxc[h] for h in range(H)], axis=1)             # (S, E)
    attn = jnp.dot(ctx2, wo_ref[...], preferred_element_type=f32) + bo_ref[...]
    x1 = attn + x                                                            # residual 1

    # ---------------- MLP block (pre-LN MLP) ----------------
    xn2 = _layernorm(x1, ln2_w_ref[...], ln2_b_ref[...])
    h1 = jnp.dot(xn2.astype(cdt), w1_ref[...],
                 preferred_element_type=f32) + b1_ref[...]                  # (S, M)
    # Exact (erf) GELU to match PyTorch nn.GELU default semantics.
    g = 0.5 * h1 * (1.0 + jax.lax.erf(h1 * (1.0 / math.sqrt(2.0))))
    h2 = jnp.dot(g.astype(cdt), w2_ref[...],
                 preferred_element_type=f32) + b2_ref[...]                  # (S, E)
    o_ref[0] = (h2 + x1).astype(o_ref.dtype)                                # residual 2


def _default_vmem_limit():
    """Generation-aware VMEM budget: ~3/4 of physical per-core VMEM, capped at 100 MiB.
    (v5e/v6e -> ~96 MiB vs a 16/32 MiB scoped default; v7x -> ~48 MiB of 64 MiB.)"""
    try:
        phys = int(pltpu.get_tpu_info().vmem_capacity_bytes)
    except Exception:
        # Hardware-info probe only (never masks kernel/lowering errors); conservative
        # fallback that is safe on every generation including v7x.
        phys = 64 << 20
    return min((phys * 3) // 4, 100 << 20)


def transformer_encoder_block(x, attention_mask, params, num_heads, *,
                              compute_dtype=jnp.bfloat16, vmem_limit_bytes=None):
    B, S, E = x.shape
    H = num_heads
    Dh = E // H
    M = params["w1"].shape[0]
    scale = 1.0 / math.sqrt(Dh)
    f32 = jnp.float32
    cdt = jnp.dtype(compute_dtype)      # bf16 operands by default (f32 accumulation)

    if vmem_limit_bytes is None:
        vmem_limit_bytes = _default_vmem_limit()

    mask3 = attention_mask.astype(f32).reshape(B, 1, S)
    row = lambda v: jnp.asarray(v, f32).reshape(1, -1)

    # Packed QKV weight (E, 3E): [Wq.T*scale | Wk.T | Wv.T].  Biases stay f32 (added
    # after the f32-accumulating matmul).
    wqkv = jnp.concatenate([jnp.asarray(params["wq"], f32).T * scale,
                            jnp.asarray(params["wk"], f32).T,
                            jnp.asarray(params["wv"], f32).T], axis=1).astype(cdt)
    bqkv = jnp.concatenate([jnp.asarray(params["bq"], f32) * scale,
                            jnp.asarray(params["bk"], f32),
                            jnp.asarray(params["bv"], f32)]).reshape(1, 3 * E)
    wo = jnp.asarray(params["wo"], f32).T.astype(cdt)    # (E, E)
    w1 = jnp.asarray(params["w1"], f32).T.astype(cdt)    # (E, M)
    w2 = jnp.asarray(params["w2"], f32).T.astype(cdt)    # (M, E)

    ops = [
        x, mask3,
        row(params["ln1_w"]), row(params["ln1_b"]),
        wqkv, bqkv, wo, row(params["bo"]),
        row(params["ln2_w"]), row(params["ln2_b"]),
        w1, row(params["b1"]), w2, row(params["b2"]),
    ]

    kernel = functools.partial(encoder_block_kernel, num_heads=H,
                               approx_recip=bool(cdt != jnp.float32))

    def const_spec(arr):
        nd = arr.ndim
        # Constant-index weight blocks never change across the grid: single buffering
        # halves weight VMEM residency (mandatory -- no silent fallback).
        return pl.BlockSpec(arr.shape, lambda b, _nd=nd: (0,) * _nd,
                            pipeline_mode=pl.Buffered(1))

    in_specs = [
        pl.BlockSpec((1, S, E), lambda b: (b, 0, 0)),    # x: one batch row per step
        pl.BlockSpec((1, 1, S), lambda b: (b, 0, 0)),    # mask row
    ] + [const_spec(a) for a in ops[2:]]

    # Advisory cost model so XLA can schedule/overlap the custom call.
    w_bytes = cdt.itemsize
    flops = 2 * B * S * (4 * E * E + 2 * S * E + 2 * E * M)
    transcendentals = B * (H * S * S + S * M)            # softmax exp + GELU erf
    bytes_accessed = (2 * B * S * E * jnp.dtype(x.dtype).itemsize   # x in + out
                      + B * S * 4                                    # mask
                      + (4 * E * E + 2 * E * M) * w_bytes            # matmul weights
                      + (3 * E + 2 * E + M + 4 * E) * 4)             # biases + LN params
    cost = pl.CostEstimate(flops=flops, transcendentals=transcendentals,
                           bytes_accessed=bytes_accessed)

    return pl.pallas_call(
        kernel,
        out_shape=jax.ShapeDtypeStruct((B, S, E), x.dtype),
        grid_spec=pltpu.PrefetchScalarGridSpec(
            num_scalar_prefetch=0,
            grid=(B,),
            in_specs=in_specs,
            out_specs=pl.BlockSpec((1, S, E), lambda b: (b, 0, 0)),
        ),
        compiler_params=pltpu.CompilerParams(
            # v7x note: if profiling shows one idle TensorCore, switch the batch axis
            # to pltpu.CORE_PARALLEL (plain "parallel" has near-zero codegen effect).
            dimension_semantics=("parallel",),
            vmem_limit_bytes=int(vmem_limit_bytes),
        ),
        cost_estimate=cost,
    )(*ops)


def ref_forward(x, mask, p, num_heads):
    """Pure-JAX f32 reference mirroring the PyTorch forward (eval mode)."""
    def ln(z, w, b):
        mu = z.mean(-1, keepdims=True)
        var = ((z - mu) ** 2).mean(-1, keepdims=True)
        return (z - mu) / jnp.sqrt(var + LN_EPS) * w + b

    B, S, E = x.shape
    Dh = E // num_heads
    xn = ln(x, p["ln1_w"], p["ln1_b"])
    q = xn @ p["wq"].T + p["bq"]
    k = xn @ p["wk"].T + p["bk"]
    v = xn @ p["wv"].T + p["bv"]
    qh = q.reshape(B, S, num_heads, Dh).transpose(0, 2, 1, 3)
    kh = k.reshape(B, S, num_heads, Dh).transpose(0, 2, 1, 3)
    vh = v.reshape(B, S, num_heads, Dh).transpose(0, 2, 1, 3)
    s = jnp.einsum("bhqd,bhkd->bhqk", qh, kh) / jnp.sqrt(Dh)
    bias = jnp.where(mask[:, None, None, :] == 0, -1e30, 0.0)
    pr = jax.nn.softmax(s + bias, axis=-1)
    o = jnp.einsum("bhqk,bhkd->bhqd", pr, vh).transpose(0, 2, 1, 3).reshape(B, S, E)
    attn = o @ p["wo"].T + p["bo"]
    x1 = attn + x
    xn2 = ln(x1, p["ln2_w"], p["ln2_b"])
    h1 = xn2 @ p["w1"].T + p["b1"]
    g = 0.5 * h1 * (1.0 + jax.lax.erf(h1 / jnp.sqrt(2.0)))
    h2 = g @ p["w2"].T + p["b2"]
    return h2 + x1


if __name__ == "__main__":
    B, S, E, H, M = 2, 8, 32, 4, 64   # small shapes: embedding_dim=32, heads=4, mlp=64

    key = jax.random.PRNGKey(0)
    ks = jax.random.split(key, 17)

    params = {
        "ln1_w": 1.0 + 0.1 * jax.random.normal(ks[0], (E,), jnp.float32),
        "ln1_b": 0.05 * jax.random.normal(ks[1], (E,), jnp.float32),
        "wq": 0.05 * jax.random.normal(ks[2], (E, E), jnp.float32),
        "wk": 0.05 * jax.random.normal(ks[3], (E, E), jnp.float32),
        "wv": 0.05 * jax.random.normal(ks[4], (E, E), jnp.float32),
        "bq": 0.05 * jax.random.normal(ks[5], (E,), jnp.float32),
        "bk": 0.05 * jax.random.normal(ks[6], (E,), jnp.float32),
        "bv": 0.05 * jax.random.normal(ks[7], (E,), jnp.float32),
        "wo": 0.05 * jax.random.normal(ks[8], (E, E), jnp.float32),
        "bo": 0.05 * jax.random.normal(ks[9], (E,), jnp.float32),
        "ln2_w": 1.0 + 0.1 * jax.random.normal(ks[10], (E,), jnp.float32),
        "ln2_b": 0.05 * jax.random.normal(ks[11], (E,), jnp.float32),
        "w1": 0.05 * jax.random.normal(ks[12], (M, E), jnp.float32),
        "b1": 0.05 * jax.random.normal(ks[13], (M,), jnp.float32),
        "w2": 0.05 * jax.random.normal(ks[14], (E, M), jnp.float32),
        "b2": 0.05 * jax.random.normal(ks[15], (E,), jnp.float32),
    }

    x = jax.random.normal(ks[16], (B, S, E), jnp.float32)
    attention_mask = jnp.array([[1, 1, 1, 1, 1, 1, 0, 0],
                                [1, 1, 1, 1, 1, 1, 1, 1]], dtype=jnp.int32)

    ref = jax.block_until_ready(ref_forward(x, attention_mask, params, H))

    # f32 compute path (tight tolerance against the f32 reference).
    out_f32 = jax.block_until_ready(
        transformer_encoder_block(x, attention_mask, params, num_heads=H,
                                  compute_dtype=jnp.float32))
    assert out_f32.shape == (B, S, E)
    assert jnp.allclose(out_f32, ref, rtol=1e-4, atol=1e-4), \
        float(jnp.max(jnp.abs(out_f32 - ref)))

    # Default path: bf16 MXU operands + f32 accumulation / LN / softmax / GELU.
    out = jax.block_until_ready(
        transformer_encoder_block(x, attention_mask, params, num_heads=H))
    assert out.shape == (B, S, E)
    assert jnp.allclose(out, ref, rtol=2e-2, atol=2e-2), \
        float(jnp.max(jnp.abs(out - ref)))

    print("KERNEL_OK")
</pallas_src>

<mosaic_0001>
module attributes {stable_mosaic.version = 11 : i64} {
  func.func @encoder_block_kernel(%arg0: i32, %arg1: memref<1x8x32xf32, #tpu.memory_space<vmem>>, %arg2: memref<1x1x8xf32, #tpu.memory_space<vmem>>, %arg3: memref<1x32xf32, #tpu.memory_space<vmem>>, %arg4: memref<1x32xf32, #tpu.memory_space<vmem>>, %arg5: memref<32x96xf32, #tpu.memory_space<vmem>>, %arg6: memref<1x96xf32, #tpu.memory_space<vmem>>, %arg7: memref<32x32xf32, #tpu.memory_space<vmem>>, %arg8: memref<1x32xf32, #tpu.memory_space<vmem>>, %arg9: memref<1x32xf32, #tpu.memory_space<vmem>>, %arg10: memref<1x32xf32, #tpu.memory_space<vmem>>, %arg11: memref<32x64xf32, #tpu.memory_space<vmem>>, %arg12: memref<1x64xf32, #tpu.memory_space<vmem>>, %arg13: memref<64x32xf32, #tpu.memory_space<vmem>>, %arg14: memref<1x32xf32, #tpu.memory_space<vmem>>, %arg15: memref<1x8x32xf32, #tpu.memory_space<vmem>>) attributes {dimension_semantics = [#tpu.dimension_semantics<parallel>], iteration_bounds = array<i64: 2>, scalar_prefetch = 0 : i64, scratch_operands = 0 : i64, tpu.core_type = #tpu.core_type<tc>, window_params = [{transform_indices = @transform_0, window_bounds = array<i64: 1, 8, 32>}, {transform_indices = @transform_1, window_bounds = array<i64: 1, 1, 8>}, {pipeline_mode = #tpu.pipeline_mode<synchronous>, transform_indices = @transform_2, window_bounds = array<i64: 1, 32>}, {pipeline_mode = #tpu.pipeline_mode<synchronous>, transform_indices = @transform_3, window_bounds = array<i64: 1, 32>}, {pipeline_mode = #tpu.pipeline_mode<synchronous>, transform_indices = @transform_4, window_bounds = array<i64: 32, 96>}, {pipeline_mode = #tpu.pipeline_mode<synchronous>, transform_indices = @transform_5, window_bounds = array<i64: 1, 96>}, {pipeline_mode = #tpu.pipeline_mode<synchronous>, transform_indices = @transform_6, window_bounds = array<i64: 32, 32>}, {pipeline_mode = #tpu.pipeline_mode<synchronous>, transform_indices = @transform_7, window_bounds = array<i64: 1, 32>}, {pipeline_mode = #tpu.pipeline_mode<synchronous>, transform_indices = @transform_8, window_bounds = array<i64: 1, 32>}, {pipeline_mode = #tpu.pipeline_mode<synchronous>, transform_indices = @transform_9, window_bounds = array<i64: 1, 32>}, {pipeline_mode = #tpu.pipeline_mode<synchronous>, transform_indices = @transform_10, window_bounds = array<i64: 32, 64>}, {pipeline_mode = #tpu.pipeline_mode<synchronous>, transform_indices = @transform_11, window_bounds = array<i64: 1, 64>}, {pipeline_mode = #tpu.pipeline_mode<synchronous>, transform_indices = @transform_12, window_bounds = array<i64: 64, 32>}, {pipeline_mode = #tpu.pipeline_mode<synchronous>, transform_indices = @transform_13, window_bounds = array<i64: 1, 32>}, {transform_indices = @transform_14, window_bounds = array<i64: 1, 8, 32>}]} {
    %c0 = arith.constant 0 : index
    %c0_0 = arith.constant 0 : index
    %c0_1 = arith.constant 0 : index
    %0 = vector.load %arg1[%c0, %c0_0, %c0_1] : memref<1x8x32xf32, #tpu.memory_space<vmem>>, vector<1x8x32xf32>
    %1 = vector.shape_cast %0 : vector<1x8x32xf32> to vector<8x32xf32>
    %c0_2 = arith.constant 0 : index
    %c0_3 = arith.constant 0 : index
    %c0_4 = arith.constant 0 : index
    %2 = vector.load %arg2[%c0_2, %c0_3, %c0_4] : memref<1x1x8xf32, #tpu.memory_space<vmem>>, vector<1x1x8xf32>
    %3 = vector.shape_cast %2 : vector<1x1x8xf32> to vector<1x8xf32>
    %c0_5 = arith.constant 0 : index
    %c0_6 = arith.constant 0 : index
    %4 = vector.load %arg3[%c0_5, %c0_6] : memref<1x32xf32, #tpu.memory_space<vmem>>, vector<1x32xf32>
    %c0_7 = arith.constant 0 : index
    %c0_8 = arith.constant 0 : index
    %5 = vector.load %arg4[%c0_7, %c0_8] : memref<1x32xf32, #tpu.memory_space<vmem>>, vector<1x32xf32>
    %cst = arith.constant dense<0.000000e+00> : vector<8xf32>
    %6 = vector.multi_reduction <add>, %1, %cst [1] : vector<8x32xf32> to vector<8xf32>
    %7 = vector.shape_cast %6 : vector<8xf32> to vector<8x1xf32>
    %cst_9 = arith.constant 3.200000e+01 : f32
    %8 = vector.broadcast %cst_9 : f32 to vector<8x1xf32>
    %9 = arith.divf %7, %8 : vector<8x1xf32>
    %10 = vector.broadcast %9 : vector<8x1xf32> to vector<8x32xf32>
    %11 = arith.subf %1, %10 : vector<8x32xf32>
    %12 = arith.mulf %11, %11 : vector<8x32xf32>
    %cst_10 = arith.constant dense<0.000000e+00> : vector<8xf32>
    %13 = vector.multi_reduction <add>, %12, %cst_10 [1] : vector<8x32xf32> to vector<8xf32>
    %14 = vector.shape_cast %13 : vector<8xf32> to vector<8x1xf32>
    %cst_11 = arith.constant 3.200000e+01 : f32
    %15 = vector.broadcast %cst_11 : f32 to vector<8x1xf32>
    %16 = arith.divf %14, %15 : vector<8x1xf32>
    %17 = vector.broadcast %9 : vector<8x1xf32> to vector<8x32xf32>
    %18 = arith.subf %1, %17 : vector<8x32xf32>
    %cst_12 = arith.constant 9.99999974E-6 : f32
    %19 = vector.broadcast %cst_12 : f32 to vector<8x1xf32>
    %20 = arith.addf %16, %19 : vector<8x1xf32>
    %21 = math.rsqrt %20 : vector<8x1xf32>
    %22 = vector.broadcast %21 : vector<8x1xf32> to vector<8x32xf32>
    %23 = arith.mulf %18, %22 : vector<8x32xf32>
    %24 = vector.broadcast %4 : vector<1x32xf32> to vector<8x32xf32>
    %25 = arith.mulf %23, %24 : vector<8x32xf32>
    %26 = vector.broadcast %5 : vector<1x32xf32> to vector<8x32xf32>
    %27 = arith.addf %25, %26 : vector<8x32xf32>
    %c0_13 = arith.constant 0 : index
    %c0_14 = arith.constant 0 : index
    %28 = vector.load %arg5[%c0_13, %c0_14] : memref<32x96xf32, #tpu.memory_space<vmem>>, vector<32x96xf32>
    %cst_15 = arith.constant dense<0.000000e+00> : vector<8x96xf32>
    %29 = tpu.matmul %27, %28, %cst_15 {dimension_numbers = #tpu.dot_dimension_numbers<[1], [0], [0], [1], [0, 0, 1, 1], [], []>} : vector<8x32xf32>, vector<32x96xf32>, vector<8x96xf32> -> vector<8x96xf32>
    %c0_16 = arith.constant 0 : index
    %c0_17 = arith.constant 0 : index
    %30 = vector.load %arg6[%c0_16, %c0_17] : memref<1x96xf32, #tpu.memory_space<vmem>>, vector<1x96xf32>
    %31 = vector.broadcast %30 : vector<1x96xf32> to vector<8x96xf32>
    %32 = arith.addf %29, %31 : vector<8x96xf32>
    %33 = vector.extract_strided_slice %32 {offsets = [0, 0], sizes = [8, 8], strides = [1, 1]} : vector<8x96xf32> to vector<8x8xf32>
    %34 = vector.extract_strided_slice %32 {offsets = [0, 8], sizes = [8, 8], strides = [1, 1]} : vector<8x96xf32> to vector<8x8xf32>
    %35 = vector.extract_strided_slice %32 {offsets = [0, 16], sizes = [8, 8], strides = [1, 1]} : vector<8x96xf32> to vector<8x8xf32>
    %36 = vector.extract_strided_slice %32 {offsets = [0, 24], sizes = [8, 8], strides = [1, 1]} : vector<8x96xf32> to vector<8x8xf32>
    %37 = vector.shape_cast %33 : vector<8x8xf32> to vector<1x8x8xf32>
    %38 = vector.shape_cast %34 : vector<8x8xf32> to vector<1x8x8xf32>
    %39 = vector.shape_cast %35 : vector<8x8xf32> to vector<1x8x8xf32>
    %40 = vector.shape_cast %36 : vector<8x8xf32> to vector<1x8x8xf32>
    %41 = tpu.concatenate %37, %38, %39, %40 in 0 : vector<1x8x8xf32>, vector<1x8x8xf32>, vector<1x8x8xf32>, vector<1x8x8xf32> -> vector<4x8x8xf32>
    %42 = vector.extract_strided_slice %32 {offsets = [0, 32], sizes = [8, 8], strides = [1, 1]} : vector<8x96xf32> to vector<8x8xf32>
    %43 = vector.extract_strided_slice %32 {offsets = [0, 40], sizes = [8, 8], strides = [1, 1]} : vector<8x96xf32> to vector<8x8xf32>
    %44 = vector.extract_strided_slice %32 {offsets = [0, 48], sizes = [8, 8], strides = [1, 1]} : vector<8x96xf32> to vector<8x8xf32>
    %45 = vector.extract_strided_slice %32 {offsets = [0, 56], sizes = [8, 8], strides = [1, 1]} : vector<8x96xf32> to vector<8x8xf32>
    %46 = vector.shape_cast %42 : vector<8x8xf32> to vector<1x8x8xf32>
    %47 = vector.shape_cast %43 : vector<8x8xf32> to vector<1x8x8xf32>
    %48 = vector.shape_cast %44 : vector<8x8xf32> to vector<1x8x8xf32>
    %49 = vector.shape_cast %45 : vector<8x8xf32> to vector<1x8x8xf32>
    %50 = tpu.concatenate %46, %47, %48, %49 in 0 : vector<1x8x8xf32>, vector<1x8x8xf32>, vector<1x8x8xf32>, vector<1x8x8xf32> -> vector<4x8x8xf32>
    %51 = vector.extract_strided_slice %32 {offsets = [0, 64], sizes = [8, 8], strides = [1, 1]} : vector<8x96xf32> to vector<8x8xf32>
    %52 = vector.extract_strided_slice %32 {offsets = [0, 72], sizes = [8, 8], strides = [1, 1]} : vector<8x96xf32> to vector<8x8xf32>
    %53 = vector.extract_strided_slice %32 {offsets = [0, 80], sizes = [8, 8], strides = [1, 1]} : vector<8x96xf32> to vector<8x8xf32>
    %54 = vector.extract_strided_slice %32 {offsets = [0, 88], sizes = [8, 8], strides = [1, 1]} : vector<8x96xf32> to vector<8x8xf32>
    %55 = vector.shape_cast %51 : vector<8x8xf32> to vector<1x8x8xf32>
    %56 = vector.shape_cast %52 : vector<8x8xf32> to vector<1x8x8xf32>
    %57 = vector.shape_cast %53 : vector<8x8xf32> to vector<1x8x8xf32>
    %58 = vector.shape_cast %54 : vector<8x8xf32> to vector<1x8x8xf32>
    %59 = tpu.concatenate %55, %56, %57, %58 in 0 : vector<1x8x8xf32>, vector<1x8x8xf32>, vector<1x8x8xf32>, vector<1x8x8xf32> -> vector<4x8x8xf32>
    %cst_18 = arith.constant 0.000000e+00 : f32
    %60 = vector.broadcast %cst_18 : f32 to vector<1x8xf32>
    %61 = arith.cmpf oeq, %3, %60 : vector<1x8xf32>
    %cst_19 = arith.constant -1.000000e+30 : f32
    %cst_20 = arith.constant 0.000000e+00 : f32
    %62 = vector.broadcast %cst_19 : f32 to vector<1x8xf32>
    %63 = vector.broadcast %cst_20 : f32 to vector<1x8xf32>
    %64 = arith.select %61, %62, %63 : vector<1x8xi1>, vector<1x8xf32>
    "tpu.trace_start"() <{level = 10 : i32, message = "hqd,hkd->hqk"}> : () -> ()
    %cst_21 = arith.constant dense<0.000000e+00> : vector<4x8x8xf32>
    %65 = tpu.matmul %41, %50, %cst_21 {dimension_numbers = #tpu.dot_dimension_numbers<[2], [2], [1], [1], [0, 0, 0, 1, 1, 1], [0], [0]>} : vector<4x8x8xf32>, vector<4x8x8xf32>, vector<4x8x8xf32> -> vector<4x8x8xf32>
    "tpu.trace_stop"() : () -> ()
    %66 = vector.shape_cast %64 : vector<1x8xf32> to vector<1x1x8xf32>
    %67 = vector.broadcast %66 : vector<1x1x8xf32> to vector<4x8x8xf32>
    %68 = arith.addf %65, %67 : vector<4x8x8xf32>
    %cst_22 = arith.constant dense<0xFF800000> : vector<4x8xf32>
    %69 = vector.multi_reduction <maximumf>, %68, %cst_22 [2] : vector<4x8x8xf32> to vector<4x8xf32>
    %70 = vector.shape_cast %69 : vector<4x8xf32> to vector<4x8x1xf32>
    %71 = vector.broadcast %70 : vector<4x8x1xf32> to vector<4x8x8xf32>
    %72 = arith.subf %68, %71 : vector<4x8x8xf32>
    %73 = math.exp %72 : vector<4x8x8xf32>
    %cst_23 = arith.constant dense<0.000000e+00> : vector<4x8xf32>
    %74 = vector.multi_reduction <add>, %73, %cst_23 [2] : vector<4x8x8xf32> to vector<4x8xf32>
    %75 = vector.shape_cast %74 : vector<4x8xf32> to vector<4x8x1xf32>
    %76 = tpu.reciprocal %75 : vector<4x8x1xf32> -> vector<4x8x1xf32>
    %77 = vector.broadcast %76 : vector<4x8x1xf32> to vector<4x8x8xf32>
    %78 = arith.mulf %73, %77 : vector<4x8x8xf32>
    "tpu.trace_start"() <{level = 10 : i32, message = "hqk,hkd->hqd"}> : () -> ()
    %cst_24 = arith.constant dense<0.000000e+00> : vector<4x8x8xf32>
    %79 = tpu.matmul %78, %59, %cst_24 {dimension_numbers = #tpu.dot_dimension_numbers<[2], [1], [1], [2], [0, 0, 0, 1, 1, 2], [0], [0]>} : vector<4x8x8xf32>, vector<4x8x8xf32>, vector<4x8x8xf32> -> vector<4x8x8xf32>
    "tpu.trace_stop"() : () -> ()
    %80 = vector.extract_strided_slice %79 {offsets = [0, 0, 0], sizes = [1, 8, 8], strides = [1, 1, 1]} : vector<4x8x8xf32> to vector<1x8x8xf32>
    %81 = vector.shape_cast %80 : vector<1x8x8xf32> to vector<8x8xf32>
    %82 = vector.extract_strided_slice %79 {offsets = [1, 0, 0], sizes = [1, 8, 8], strides = [1, 1, 1]} : vector<4x8x8xf32> to vector<1x8x8xf32>
    %83 = vector.shape_cast %82 : vector<1x8x8xf32> to vector<8x8xf32>
    %84 = vector.extract_strided_slice %79 {offsets = [2, 0, 0], sizes = [1, 8, 8], strides = [1, 1, 1]} : vector<4x8x8xf32> to vector<1x8x8xf32>
    %85 = vector.shape_cast %84 : vector<1x8x8xf32> to vector<8x8xf32>
    %86 = vector.extract_strided_slice %79 {offsets = [3, 0, 0], sizes = [1, 8, 8], strides = [1, 1, 1]} : vector<4x8x8xf32> to vector<1x8x8xf32>
    %87 = vector.shape_cast %86 : vector<1x8x8xf32> to vector<8x8xf32>
    %88 = tpu.concatenate %81, %83, %85, %87 in 1 : vector<8x8xf32>, vector<8x8xf32>, vector<8x8xf32>, vector<8x8xf32> -> vector<8x32xf32>
    %c0_25 = arith.constant 0 : index
    %c0_26 = arith.constant 0 : index
    %89 = vector.load %arg7[%c0_25, %c0_26] : memref<32x32xf32, #tpu.memory_space<vmem>>, vector<32x32xf32>
    %cst_27 = arith.constant dense<0.000000e+00> : vector<8x32xf32>
    %90 = tpu.matmul %88, %89, %cst_27 {dimension_numbers = #tpu.dot_dimension_numbers<[1], [0], [0], [1], [0, 0, 1, 1], [], []>} : vector<8x32xf32>, vector<32x32xf32>, vector<8x32xf32> -> vector<8x32xf32>
    %c0_28 = arith.constant 0 : index
    %c0_29 = arith.constant 0 : index
    %91 = vector.load %arg8[%c0_28, %c0_29] : memref<1x32xf32, #tpu.memory_space<vmem>>, vector<1x32xf32>
    %92 = vector.broadcast %91 : vector<1x32xf32> to vector<8x32xf32>
    %93 = arith.addf %90, %92 : vector<8x32xf32>
    %94 = arith.addf %93, %1 : vector<8x32xf32>
    %c0_30 = arith.constant 0 : index
    %c0_31 = arith.constant 0 : index
    %95 = vector.load %arg9[%c0_30, %c0_31] : memref<1x32xf32, #tpu.memory_space<vmem>>, vector<1x32xf32>
    %c0_32 = arith.constant 0 : index
    %c0_33 = arith.constant 0 : index
    %96 = vector.load %arg10[%c0_32, %c0_33] : memref<1x32xf32, #tpu.memory_space<vmem>>, vector<1x32xf32>
    %cst_34 = arith.constant dense<0.000000e+00> : vector<8xf32>
    %97 = vector.multi_reduction <add>, %94, %cst_34 [1] : vector<8x32xf32> to vector<8xf32>
    %98 = vector.shape_cast %97 : vector<8xf32> to vector<8x1xf32>
    %cst_35 = arith.constant 3.200000e+01 : f32
    %99 = vector.broadcast %cst_35 : f32 to vector<8x1xf32>
    %100 = arith.divf %98, %99 : vector<8x1xf32>
    %101 = vector.broadcast %100 : vector<8x1xf32> to vector<8x32xf32>
    %102 = arith.subf %94, %101 : vector<8x32xf32>
    %103 = arith.mulf %102, %102 : vector<8x32xf32>
    %cst_36 = arith.constant dense<0.000000e+00> : vector<8xf32>
    %104 = vector.multi_reduction <add>, %103, %cst_36 [1] : vector<8x32xf32> to vector<8xf32>
    %105 = vector.shape_cast %104 : vector<8xf32> to vector<8x1xf32>
    %cst_37 = arith.constant 3.200000e+01 : f32
    %106 = vector.broadcast %cst_37 : f32 to vector<8x1xf32>
    %107 = arith.divf %105, %106 : vector<8x1xf32>
    %108 = vector.broadcast %100 : vector<8x1xf32> to vector<8x32xf32>
    %109 = arith.subf %94, %108 : vector<8x32xf32>
    %cst_38 = arith.constant 9.99999974E-6 : f32
    %110 = vector.broadcast %cst_38 : f32 to vector<8x1xf32>
    %111 = arith.addf %107, %110 : vector<8x1xf32>
    %112 = math.rsqrt %111 : vector<8x1xf32>
    %113 = vector.broadcast %112 : vector<8x1xf32> to vector<8x32xf32>
    %114 = arith.mulf %109, %113 : vector<8x32xf32>
    %115 = vector.broadcast %95 : vector<1x32xf32> to vector<8x32xf32>
    %116 = arith.mulf %114, %115 : vector<8x32xf32>
    %117 = vector.broadcast %96 : vector<1x32xf32> to vector<8x32xf32>
    %118 = arith.addf %116, %117 : vector<8x32xf32>
    %c0_39 = arith.constant 0 : index
    %c0_40 = arith.constant 0 : index
    %119 = vector.load %arg11[%c0_39, %c0_40] : memref<32x64xf32, #tpu.memory_space<vmem>>, vector<32x64xf32>
    %cst_41 = arith.constant dense<0.000000e+00> : vector<8x64xf32>
    %120 = tpu.matmul %118, %119, %cst_41 {dimension_numbers = #tpu.dot_dimension_numbers<[1], [0], [0], [1], [0, 0, 1, 1], [], []>} : vector<8x32xf32>, vector<32x64xf32>, vector<8x64xf32> -> vector<8x64xf32>
    %c0_42 = arith.constant 0 : index
    %c0_43 = arith.constant 0 : index
    %121 = vector.load %arg12[%c0_42, %c0_43] : memref<1x64xf32, #tpu.memory_space<vmem>>, vector<1x64xf32>
    %122 = vector.broadcast %121 : vector<1x64xf32> to vector<8x64xf32>
    %123 = arith.addf %120, %122 : vector<8x64xf32>
    %cst_44 = arith.constant 5.000000e-01 : f32
    %124 = vector.broadcast %cst_44 : f32 to vector<8x64xf32>
    %125 = arith.mulf %124, %123 : vector<8x64xf32>
    %cst_45 = arith.constant 0.707106769 : f32
    %126 = vector.broadcast %cst_45 : f32 to vector<8x64xf32>
    %127 = arith.mulf %123, %126 : vector<8x64xf32>
    %128 = math.erf %127 : vector<8x64xf32>
    %cst_46 = arith.constant 1.000000e+00 : f32
    %129 = vector.broadcast %cst_46 : f32 to vector<8x64xf32>
    %130 = arith.addf %129, %128 : vector<8x64xf32>
    %131 = arith.mulf %125, %130 : vector<8x64xf32>
    %c0_47 = arith.constant 0 : index
    %c0_48 = arith.constant 0 : index
    %132 = vector.load %arg13[%c0_47, %c0_48] : memref<64x32xf32, #tpu.memory_space<vmem>>, vector<64x32xf32>
    %cst_49 = arith.constant dense<0.000000e+00> : vector<8x32xf32>
    %133 = tpu.matmul %131, %132, %cst_49 {dimension_numbers = #tpu.dot_dimension_numbers<[1], [0], [0], [1], [0, 0, 1, 1], [], []>} : vector<8x64xf32>, vector<64x32xf32>, vector<8x32xf32> -> vector<8x32xf32>
    %c0_50 = arith.constant 0 : index
    %c0_51 = arith.constant 0 : index
    %134 = vector.load %arg14[%c0_50, %c0_51] : memref<1x32xf32, #tpu.memory_space<vmem>>, vector<1x32xf32>
    %135 = vector.broadcast %134 : vector<1x32xf32> to vector<8x32xf32>
    %136 = arith.addf %133, %135 : vector<8x32xf32>
    %137 = arith.addf %136, %94 : vector<8x32xf32>
    %c0_52 = arith.constant 0 : index
    %c0_53 = arith.constant 0 : index
    %c0_54 = arith.constant 0 : index
    %138 = vector.load %arg15[%c0_52, %c0_53, %c0_54] : memref<1x8x32xf32, #tpu.memory_space<vmem>>, vector<1x8x32xf32>
    %139 = vector.shape_cast %138 : vector<1x8x32xf32> to vector<8x32xf32>
    %140 = vector.shape_cast %137 : vector<8x32xf32> to vector<1x8x32xf32>
    tpu.vector_store %arg15[%c0_52, %c0_53, %c0_54], %140 {strides = array<i32>} : memref<1x8x32xf32, #tpu.memory_space<vmem>>, vector<1x8x32xf32>,
    return
  }
  func.func @transform_0(%arg0: i32) -> (i32, i32, i32) {
    %c0_i32 = arith.constant 0 : i32
    %c0_i32_0 = arith.constant 0 : i32
    %c0_i32_1 = arith.constant 0 : i32
    return %arg0, %c0_i32, %c0_i32_0 : i32, i32, i32
  }
  func.func @transform_1(%arg0: i32) -> (i32, i32, i32) {
    %c0_i32 = arith.constant 0 : i32
    %c0_i32_0 = arith.constant 0 : i32
    %c0_i32_1 = arith.constant 0 : i32
    return %arg0, %c0_i32, %c0_i32_0 : i32, i32, i32
  }
  func.func @transform_2(%arg0: i32) -> (i32, i32) {
    %c0_i32 = arith.constant 0 : i32
    %c0_i32_0 = arith.constant 0 : i32
    %c0_i32_1 = arith.constant 0 : i32
    return %c0_i32, %c0_i32_0 : i32, i32
  }
  func.func @transform_3(%arg0: i32) -> (i32, i32) {
    %c0_i32 = arith.constant 0 : i32
    %c0_i32_0 = arith.constant 0 : i32
    %c0_i32_1 = arith.constant 0 : i32
    return %c0_i32, %c0_i32_0 : i32, i32
  }
  func.func @transform_4(%arg0: i32) -> (i32, i32) {
    %c0_i32 = arith.constant 0 : i32
    %c0_i32_0 = arith.constant 0 : i32
    %c0_i32_1 = arith.constant 0 : i32
    return %c0_i32, %c0_i32_0 : i32, i32
  }
  func.func @transform_5(%arg0: i32) -> (i32, i32) {
    %c0_i32 = arith.constant 0 : i32
    %c0_i32_0 = arith.constant 0 : i32
    %c0_i32_1 = arith.constant 0 : i32
    return %c0_i32, %c0_i32_0 : i32, i32
  }
  func.func @transform_6(%arg0: i32) -> (i32, i32) {
    %c0_i32 = arith.constant 0 : i32
    %c0_i32_0 = arith.constant 0 : i32
    %c0_i32_1 = arith.constant 0 : i32
    return %c0_i32, %c0_i32_0 : i32, i32
  }
  func.func @transform_7(%arg0: i32) -> (i32, i32) {
    %c0_i32 = arith.constant 0 : i32
    %c0_i32_0 = arith.constant 0 : i32
    %c0_i32_1 = arith.constant 0 : i32
    return %c0_i32, %c0_i32_0 : i32, i32
  }
  func.func @transform_8(%arg0: i32) -> (i32, i32) {
    %c0_i32 = arith.constant 0 : i32
    %c0_i32_0 = arith.constant 0 : i32
    %c0_i32_1 = arith.constant 0 : i32
    return %c0_i32, %c0_i32_0 : i32, i32
  }
  func.func @transform_9(%arg0: i32) -> (i32, i32) {
    %c0_i32 = arith.constant 0 : i32
    %c0_i32_0 = arith.constant 0 : i32
    %c0_i32_1 = arith.constant 0 : i32
    return %c0_i32, %c0_i32_0 : i32, i32
  }
  func.func @transform_10(%arg0: i32) -> (i32, i32) {
    %c0_i32 = arith.constant 0 : i32
    %c0_i32_0 = arith.constant 0 : i32
    %c0_i32_1 = arith.constant 0 : i32
    return %c0_i32, %c0_i32_0 : i32, i32
  }
  func.func @transform_11(%arg0: i32) -> (i32, i32) {
    %c0_i32 = arith.constant 0 : i32
    %c0_i32_0 = arith.constant 0 : i32
    %c0_i32_1 = arith.constant 0 : i32
    return %c0_i32, %c0_i32_0 : i32, i32
  }
  func.func @transform_12(%arg0: i32) -> (i32, i32) {
    %c0_i32 = arith.constant 0 : i32
    %c0_i32_0 = arith.constant 0 : i32
    %c0_i32_1 = arith.constant 0 : i32
    return %c0_i32, %c0_i32_0 : i32, i32
  }
  func.func @transform_13(%arg0: i32) -> (i32, i32) {
    %c0_i32 = arith.constant 0 : i32
    %c0_i32_0 = arith.constant 0 : i32
    %c0_i32_1 = arith.constant 0 : i32
    return %c0_i32, %c0_i32_0 : i32, i32
  }
  func.func @transform_14(%arg0: i32) -> (i32, i32, i32) {
    %c0_i32 = arith.constant 0 : i32
    %c0_i32_0 = arith.constant 0 : i32
    %c0_i32_1 = arith.constant 0 : i32
    return %arg0, %c0_i32, %c0_i32_0 : i32, i32, i32
  }
}

</mosaic_0001>

<llo_original>
// kernel: tpu_custom_call.1
$region0: #{tpu_custom_call.1}
  #allocation0 [shape = 'u32[]', space=smem, size = 0x4, offset = 0x4, fixed_abs, tag = 'smem constant byte address 0x4 - core index']
  #allocation1 [shape = 'u32[72,128]{1,0:T(1,128)}', space=vmem, size = 0x9000, scoped, tag = 'internal scratch']
  %s0 = inlined_call_operand.hbm [shape: f32[2,8,32], index: 0, kind: input, shape index: {}]
  %s1 = inlined_call_operand.hbm [shape: f32[2,1,8], index: 1, kind: input, shape index: {}]
  %s2 = inlined_call_operand.vmem [shape: f32[1,32], index: 2, kind: input, shape index: {}]
  %s3 = inlined_call_operand.hbm [shape: f32[1,32], index: 3, kind: input, shape index: {}]
  %s4 = inlined_call_operand.vmem [shape: f32[32,96], index: 4, kind: input, shape index: {}]
  %s5 = inlined_call_operand.vmem [shape: f32[1,96], index: 5, kind: input, shape index: {}]
  %s6 = inlined_call_operand.vmem [shape: f32[32,32], index: 6, kind: input, shape index: {}]
  %s7 = inlined_call_operand.vmem [shape: f32[1,32], index: 7, kind: input, shape index: {}]
  %s8 = inlined_call_operand.vmem [shape: f32[1,32], index: 8, kind: input, shape index: {}]
  %s9 = inlined_call_operand.vmem [shape: f32[1,32], index: 9, kind: input, shape index: {}]
  %s10 = inlined_call_operand.vmem [shape: f32[32,64], index: 10, kind: input, shape index: {}]
  %s11 = inlined_call_operand.vmem [shape: f32[1,64], index: 11, kind: input, shape index: {}]
  %s12 = inlined_call_operand.vmem [shape: f32[64,32], index: 12, kind: input, shape index: {}]
  %s13 = inlined_call_operand.vmem [shape: f32[1,32], index: 13, kind: input, shape index: {}]
  %s14 = inlined_call_operand.hbm [shape: f32[2,8,32], index: 14, kind: output, shape index: {}]
  %s15 = sld [smem:[#allocation0]]
  $region101: #{tpu_custom_call.1} parent=0
    _
  %s17 = ssub.s32 1, %s15
  %s18 = scalar_select 0, %s17, %s15
  $region1: #{tpu_custom_call.1} parent=0
    #allocation2 [shape = 'u8[8192]{0}', space=vmem, size = 0x2000, scoped, tag = 'input window, operand 0']
    #allocation3 [shape = 's32[2]{0}', space=sflag, size = 0x8, scoped, tag = 'scoped memory for tpu_custom_call.1']
    #allocation4 [shape = 's32[2]{0}', space=sflag, size = 0x8, scoped, tag = 'scoped memory for tpu_custom_call.1']
    #allocation5 [shape = 'u8[1024]{0}', space=vmem, size = 0x400, scoped, tag = 'input window, operand 1']
    #allocation6 [shape = 's32[2]{0}', space=sflag, size = 0x8, scoped, tag = 'scoped memory for tpu_custom_call.1']
    #allocation7 [shape = 'u8[512]{0}', space=vmem, size = 0x400, scoped, tag = 'input window, operand 3, single buffered']
    #allocation8 [shape = 'u8[8192]{0}', space=vmem, size = 0x2000, scoped, tag = 'output window, operand 0']
    %19 = vsyncpa [#allocation3], 0
    %s20 = scalar_lea.sflag [#allocation3], 1
    %21 = vsyncpa %s20, 0
    %22 = vsyncpa [#allocation6], 0
    %s23 = scalar_lea.sflag [#allocation6], 1
    %24 = vsyncpa %s23, 0
    %25 = vsyncpa [#allocation4], 0
    %s26 = scalar_lea.sflag [#allocation4], 1
    %27 = vsyncpa %s26, 0
    loop: start=0, step=1, limit=4
    $region2: #{tpu_custom_call.1} parent=1 // loop_pre_header
      _
    $region3: #{tpu_custom_call.1} parent=1 // loop_header
      %s29 = sphi 0, %s33
      %p30 = scmp.ge.s32.totalorder %s29, 4
      %s39 = sphi 0, %s41
      %s42 = sphi 0, %s39
      %s43 = sphi 0, %s42
      %s59 = sphi 0, %s43
      %s65 = sphi 0, %s67
      %s68 = sphi 0, %s65
      %s69 = sphi 0, %s68
      %s85 = sphi 0, %s69
      %s89 = sphi 0, %s89
      %s91 = sphi 0, %s89
      %s92 = sphi 0, %s91
      %s106 = sphi 0, %s92
      %s110 = sphi 0, %s110
      %s112 = sphi 0, %s110
      %s113 = sphi 0, %s112
      %s127 = sphi 0, %s113
      %s131 = sphi 0, %s131
      %s133 = sphi 0, %s131
      %s134 = sphi 0, %s133
      %s148 = sphi 0, %s134
      %s152 = sphi 0, %s152
      %s154 = sphi 0, %s152
      %s155 = sphi 0, %s154
      %s169 = sphi 0, %s155
      %s173 = sphi 0, %s173
      %s175 = sphi 0, %s173
      %s176 = sphi 0, %s175
      %s190 = sphi 0, %s176
      %s194 = sphi 0, %s194
      %s196 = sphi 0, %s194
      %s197 = sphi 0, %s196
      %s211 = sphi 0, %s197
      %s215 = sphi 0, %s215
      %s217 = sphi 0, %s215
      %s218 = sphi 0, %s217
      %s232 = sphi 0, %s218
      %s236 = sphi 0, %s236
      %s238 = sphi 0, %s236
      %s239 = sphi 0, %s238
      %s253 = sphi 0, %s239
      %s257 = sphi 0, %s257
      %s259 = sphi 0, %s257
      %s260 = sphi 0, %s259
      %s274 = sphi 0, %s260
      %s278 = sphi 0, %s278
      %s280 = sphi 0, %s278
      %s281 = sphi 0, %s280
      %s295 = sphi 0, %s281
      %s299 = sphi 0, %s299
      %s301 = sphi 0, %s299
      %s302 = sphi 0, %s301
      %s316 = sphi 0, %s302
      %s320 = sphi 0, %s320
      %s322 = sphi 0, %s320
      %s323 = sphi 0, %s322
      %s337 = sphi 0, %s323
      %s343 = sphi 0, %s345
      %s346 = sphi 0, %s343
      %s347 = sphi 0, %s346
      %s363 = sphi 0, %s347
    $region4: #{tpu_custom_call.1} parent=1 // loop_header_branch
      %32 = sbr.rel (%p30) target = $region8
    $region5: #{tpu_custom_call.1} parent=1 // loop_body
      %s34 = ssub.s32 %s29, 1
      %s35 = ssub.s32 %s29, 2
      %s36 = sadd.s32 %s29, 1
      %s37 = ssub.s32 %s29, %s36
      %p38 = scmp.eq.s32.totalorder %s37, 0
      %s40 = sadd.s32 %s39, 1
      %s41 = scalar_select %p38, %s39, %s40
      %p44 = pneg %p38
      %p45 = scmp.eq.s32.totalorder %s29, 1
      %p46 = por %p44, %p45
      %p47 = scmp.ne.s32.totalorder %s39, %s42
      %p48 = scmp.eq.s32.totalorder %s29, 0
      %p49 = por %p47, %p48
      %p50 = scmp.ne.s32.totalorder %s39, %s42
      %p51 = scmp.eq.s32.totalorder %s34, 1
      %p52 = por %p50, %p51
      %p53 = scmp.ne.s32.totalorder %s42, %s43
      %p54 = scmp.eq.s32.totalorder %s34, 0
      %p55 = por %p53, %p54
      %p56 = scmp.ne.s32.totalorder %s42, %s43
      %p57 = scmp.eq.s32.totalorder %s35, 1
      %p58 = por %p56, %p57
      %p60 = scmp.ne.s32.totalorder %s43, %s59
      %p61 = scmp.eq.s32.totalorder %s35, 0
      %p62 = por %p60, %p61
      %s63 = ssub.s32 %s29, %s36
      %p64 = scmp.eq.s32.totalorder %s63, 0
      %s66 = sadd.s32 %s65, 1
      %s67 = scalar_select %p64, %s65, %s66
      %p70 = pneg %p64
      %p71 = scmp.eq.s32.totalorder %s29, 1
      %p72 = por %p70, %p71
      %p73 = scmp.ne.s32.totalorder %s65, %s68
      %p74 = scmp.eq.s32.totalorder %s29, 0
      %p75 = por %p73, %p74
      %p76 = scmp.ne.s32.totalorder %s65, %s68
      %p77 = scmp.eq.s32.totalorder %s34, 1
      %p78 = por %p76, %p77
      %p79 = scmp.ne.s32.totalorder %s68, %s69
      %p80 = scmp.eq.s32.totalorder %s34, 0
      %p81 = por %p79, %p80
      %p82 = scmp.ne.s32.totalorder %s68, %s69
      %p83 = scmp.eq.s32.totalorder %s35, 1
      %p84 = por %p82, %p83
      %p86 = scmp.ne.s32.totalorder %s69, %s85
      %p87 = scmp.eq.s32.totalorder %s35, 0
      %p88 = por %p86, %p87
      %s90 = sadd.s32 %s89, 1
      %p93 = scmp.eq.s32.totalorder %s29, 1
      %p94 = scmp.ne.s32.totalorder %s89, %s91
      %p95 = scmp.eq.s32.totalorder %s29, 0
      %p96 = por %p94, %p95
      %p97 = scmp.ne.s32.totalorder %s89, %s91
      %p98 = scmp.eq.s32.totalorder %s34, 1
      %p99 = por %p97, %p98
      %p100 = scmp.ne.s32.totalorder %s91, %s92
      %p101 = scmp.eq.s32.totalorder %s34, 0
      %p102 = por %p100, %p101
      %p103 = scmp.ne.s32.totalorder %s91, %s92
      %p104 = scmp.eq.s32.totalorder %s35, 1
      %p105 = por %p103, %p104
      %p107 = scmp.ne.s32.totalorder %s92, %s106
      %p108 = scmp.eq.s32.totalorder %s35, 0
      %p109 = por %p107, %p108
      %s111 = sadd.s32 %s110, 1
      %p114 = scmp.eq.s32.totalorder %s29, 1
      %p115 = scmp.ne.s32.totalorder %s110, %s112
      %p116 = scmp.eq.s32.totalorder %s29, 0
      %p117 = por %p115, %p116
      %p118 = scmp.ne.s32.totalorder %s110, %s112
      %p119 = scmp.eq.s32.totalorder %s34, 1
      %p120 = por %p118, %p119
      %p121 = scmp.ne.s32.totalorder %s112, %s113
      %p122 = scmp.eq.s32.totalorder %s34, 0
      %p123 = por %p121, %p122
      %p124 = scmp.ne.s32.totalorder %s112, %s113
      %p125 = scmp.eq.s32.totalorder %s35, 1
      %p126 = por %p124, %p125
      %p128 = scmp.ne.s32.totalorder %s113, %s127
      %p129 = scmp.eq.s32.totalorder %s35, 0
      %p130 = por %p128, %p129
      %s132 = sadd.s32 %s131, 1
      %p135 = scmp.eq.s32.totalorder %s29, 1
      %p136 = scmp.ne.s32.totalorder %s131, %s133
      %p137 = scmp.eq.s32.totalorder %s29, 0
      %p138 = por %p136, %p137
      %p139 = scmp.ne.s32.totalorder %s131, %s133
      %p140 = scmp.eq.s32.totalorder %s34, 1
      %p141 = por %p139, %p140
      %p142 = scmp.ne.s32.totalorder %s133, %s134
      %p143 = scmp.eq.s32.totalorder %s34, 0
      %p144 = por %p142, %p143
      %p145 = scmp.ne.s32.totalorder %s133, %s134
      %p146 = scmp.eq.s32.totalorder %s35, 1
      %p147 = por %p145, %p146
      %p149 = scmp.ne.s32.totalorder %s134, %s148
      %p150 = scmp.eq.s32.totalorder %s35, 0
      %p151 = por %p149, %p150
      %s153 = sadd.s32 %s152, 1
      %p156 = scmp.eq.s32.totalorder %s29, 1
      %p157 = scmp.ne.s32.totalorder %s152, %s154
      %p158 = scmp.eq.s32.totalorder %s29, 0
      %p159 = por %p157, %p158
      %p160 = scmp.ne.s32.totalorder %s152, %s154
      %p161 = scmp.eq.s32.totalorder %s34, 1
      %p162 = por %p160, %p161
      %p163 = scmp.ne.s32.totalorder %s154, %s155
      %p164 = scmp.eq.s32.totalorder %s34, 0
      %p165 = por %p163, %p164
      %p166 = scmp.ne.s32.totalorder %s154, %s155
      %p167 = scmp.eq.s32.totalorder %s35, 1
      %p168 = por %p166, %p167
      %p170 = scmp.ne.s32.totalorder %s155, %s169
      %p171 = scmp.eq.s32.totalorder %s35, 0
      %p172 = por %p170, %p171
      %s174 = sadd.s32 %s173, 1
      %p177 = scmp.eq.s32.totalorder %s29, 1
      %p178 = scmp.ne.s32.totalorder %s173, %s175
      %p179 = scmp.eq.s32.totalorder %s29, 0
      %p180 = por %p178, %p179
      %p181 = scmp.ne.s32.totalorder %s173, %s175
      %p182 = scmp.eq.s32.totalorder %s34, 1
      %p183 = por %p181, %p182
      %p184 = scmp.ne.s32.totalorder %s175, %s176
      %p185 = scmp.eq.s32.totalorder %s34, 0
      %p186 = por %p184, %p185
      %p187 = scmp.ne.s32.totalorder %s175, %s176
      %p188 = scmp.eq.s32.totalorder %s35, 1
      %p189 = por %p187, %p188
      %p191 = scmp.ne.s32.totalorder %s176, %s190
      %p192 = scmp.eq.s32.totalorder %s35, 0
      %p193 = por %p191, %p192
      %s195 = sadd.s32 %s194, 1
      %p198 = scmp.eq.s32.totalorder %s29, 1
      %p199 = scmp.ne.s32.totalorder %s194, %s196
      %p200 = scmp.eq.s32.totalorder %s29, 0
      %p201 = por %p199, %p200
      %p202 = scmp.ne.s32.totalorder %s194, %s196
      %p203 = scmp.eq.s32.totalorder %s34, 1
      %p204 = por %p202, %p203
      %p205 = scmp.ne.s32.totalorder %s196, %s197
      %p206 = scmp.eq.s32.totalorder %s34, 0
      %p207 = por %p205, %p206
      %p208 = scmp.ne.s32.totalorder %s196, %s197
      %p209 = scmp.eq.s32.totalorder %s35, 1
      %p210 = por %p208, %p209
      %p212 = scmp.ne.s32.totalorder %s197, %s211
      %p213 = scmp.eq.s32.totalorder %s35, 0
      %p214 = por %p212, %p213
      %s216 = sadd.s32 %s215, 1
      %p219 = scmp.eq.s32.totalorder %s29, 1
      %p220 = scmp.ne.s32.totalorder %s215, %s217
      %p221 = scmp.eq.s32.totalorder %s29, 0
      %p222 = por %p220, %p221
      %p223 = scmp.ne.s32.totalorder %s215, %s217
      %p224 = scmp.eq.s32.totalorder %s34, 1
      %p225 = por %p223, %p224
      %p226 = scmp.ne.s32.totalorder %s217, %s218
      %p227 = scmp.eq.s32.totalorder %s34, 0
      %p228 = por %p226, %p227
      %p229 = scmp.ne.s32.totalorder %s217, %s218
      %p230 = scmp.eq.s32.totalorder %s35, 1
      %p231 = por %p229, %p230
      %p233 = scmp.ne.s32.totalorder %s218, %s232
      %p234 = scmp.eq.s32.totalorder %s35, 0
      %p235 = por %p233, %p234
      %s237 = sadd.s32 %s236, 1
      %p240 = scmp.eq.s32.totalorder %s29, 1
      %p241 = scmp.ne.s32.totalorder %s236, %s238
      %p242 = scmp.eq.s32.totalorder %s29, 0
      %p243 = por %p241, %p242
      %p244 = scmp.ne.s32.totalorder %s236, %s238
      %p245 = scmp.eq.s32.totalorder %s34, 1
      %p246 = por %p244, %p245
      %p247 = scmp.ne.s32.totalorder %s238, %s239
      %p248 = scmp.eq.s32.totalorder %s34, 0
      %p249 = por %p247, %p248
      %p250 = scmp.ne.s32.totalorder %s238, %s239
      %p251 = scmp.eq.s32.totalorder %s35, 1
      %p252 = por %p250, %p251
      %p254 = scmp.ne.s32.totalorder %s239, %s253
      %p255 = scmp.eq.s32.totalorder %s35, 0
      %p256 = por %p254, %p255
      %s258 = sadd.s32 %s257, 1
      %p261 = scmp.eq.s32.totalorder %s29, 1
      %p262 = scmp.ne.s32.totalorder %s257, %s259
      %p263 = scmp.eq.s32.totalorder %s29, 0
      %p264 = por %p262, %p263
      %p265 = scmp.ne.s32.totalorder %s257, %s259
      %p266 = scmp.eq.s32.totalorder %s34, 1
      %p267 = por %p265, %p266
      %p268 = scmp.ne.s32.totalorder %s259, %s260
      %p269 = scmp.eq.s32.totalorder %s34, 0
      %p270 = por %p268, %p269
      %p271 = scmp.ne.s32.totalorder %s259, %s260
      %p272 = scmp.eq.s32.totalorder %s35, 1
      %p273 = por %p271, %p272
      %p275 = scmp.ne.s32.totalorder %s260, %s274
      %p276 = scmp.eq.s32.totalorder %s35, 0
      %p277 = por %p275, %p276
      %s279 = sadd.s32 %s278, 1
      %p282 = scmp.eq.s32.totalorder %s29, 1
      %p283 = scmp.ne.s32.totalorder %s278, %s280
      %p284 = scmp.eq.s32.totalorder %s29, 0
      %p285 = por %p283, %p284
      %p286 = scmp.ne.s32.totalorder %s278, %s280
      %p287 = scmp.eq.s32.totalorder %s34, 1
      %p288 = por %p286, %p287
      %p289 = scmp.ne.s32.totalorder %s280, %s281
      %p290 = scmp.eq.s32.totalorder %s34, 0
      %p291 = por %p289, %p290
      %p292 = scmp.ne.s32.totalorder %s280, %s281
      %p293 = scmp.eq.s32.totalorder %s35, 1
      %p294 = por %p292, %p293
      %p296 = scmp.ne.s32.totalorder %s281, %s295
      %p297 = scmp.eq.s32.totalorder %s35, 0
      %p298 = por %p296, %p297
      %s300 = sadd.s32 %s299, 1
      %p303 = scmp.eq.s32.totalorder %s29, 1
      %p304 = scmp.ne.s32.totalorder %s299, %s301
      %p305 = scmp.eq.s32.totalorder %s29, 0
      %p306 = por %p304, %p305
      %p307 = scmp.ne.s32.totalorder %s299, %s301
      %p308 = scmp.eq.s32.totalorder %s34, 1
      %p309 = por %p307, %p308
      %p310 = scmp.ne.s32.totalorder %s301, %s302
      %p311 = scmp.eq.s32.totalorder %s34, 0
      %p312 = por %p310, %p311
      %p313 = scmp.ne.s32.totalorder %s301, %s302
      %p314 = scmp.eq.s32.totalorder %s35, 1
      %p315 = por %p313, %p314
      %p317 = scmp.ne.s32.totalorder %s302, %s316
      %p318 = scmp.eq.s32.totalorder %s35, 0
      %p319 = por %p317, %p318
      %s321 = sadd.s32 %s320, 1
      %p324 = scmp.eq.s32.totalorder %s29, 1
      %p325 = scmp.ne.s32.totalorder %s320, %s322
      %p326 = scmp.eq.s32.totalorder %s29, 0
      %p327 = por %p325, %p326
      %p328 = scmp.ne.s32.totalorder %s320, %s322
      %p329 = scmp.eq.s32.totalorder %s34, 1
      %p330 = por %p328, %p329
      %p331 = scmp.ne.s32.totalorder %s322, %s323
      %p332 = scmp.eq.s32.totalorder %s34, 0
      %p333 = por %p331, %p332
      %p334 = scmp.ne.s32.totalorder %s322, %s323
      %p335 = scmp.eq.s32.totalorder %s35, 1
      %p336 = por %p334, %p335
      %p338 = scmp.ne.s32.totalorder %s323, %s337
      %p339 = scmp.eq.s32.totalorder %s35, 0
      %p340 = por %p338, %p339
      %s341 = ssub.s32 %s29, %s36
      %p342 = scmp.eq.s32.totalorder %s341, 0
      %s344 = sadd.s32 %s343, 1
      %s345 = scalar_select %p342, %s343, %s344
      %p348 = pneg %p342
      %p349 = scmp.eq.s32.totalorder %s29, 1
      %p350 = por %p348, %p349
      %p351 = scmp.ne.s32.totalorder %s343, %s346
      %p352 = scmp.eq.s32.totalorder %s29, 0
      %p353 = por %p351, %p352
      %p354 = scmp.ne.s32.totalorder %s343, %s346
      %p355 = scmp.eq.s32.totalorder %s34, 1
      %p356 = por %p354, %p355
      %p357 = scmp.ne.s32.totalorder %s346, %s347
      %p358 = scmp.eq.s32.totalorder %s34, 0
      %p359 = por %p357, %p358
      %p360 = scmp.ne.s32.totalorder %s346, %s347
      %p361 = scmp.eq.s32.totalorder %s35, 1
      %p362 = por %p360, %p361
      %p364 = scmp.ne.s32.totalorder %s347, %s363
      %p365 = scmp.eq.s32.totalorder %s35, 0
      %p366 = por %p364, %p365
      %p367 = scmp.le.s32.totalorder 1, %s29
      %p368 = scmp.lt.s32.totalorder %s29, 3
      %p369 = pnand %p367, %p368
      %p370 = pneg %p369
      // Predicated region
      $region9: #{tpu_custom_call.1} parent=5 // pred_check
        _
      $region10: #{tpu_custom_call.1} parent=5 // pred_check_branch
        %372 = sbr.rel (%p369) target = $region12
      $region11: #{tpu_custom_call.1} parent=5 // pred_region
        %s373 = ssub.s32 %s29, 1
        // Predicated region
        $region13: #{tpu_custom_call.1} parent=11 // pred_check
          %p374 = pneg %p102
        $region14: #{tpu_custom_call.1} parent=11 // pred_check_branch
          %376 = sbr.rel (%p374) target = $region16
        $region15: #{tpu_custom_call.1} parent=11 // pred_region
          _
        $region16: #{tpu_custom_call.1} parent=11 // pred_fallthru
          _
        // Predicated region
        $region17: #{tpu_custom_call.1} parent=11 // pred_check
          %p377 = pneg %p123
        $region18: #{tpu_custom_call.1} parent=11 // pred_check_branch
          %379 = sbr.rel (%p377) target = $region20
        $region19: #{tpu_custom_call.1} parent=11 // pred_region
          %381 = vsyncadd [#allocation6], 0
          %s383 = sshll.u32 %s3, 4
          %s384 = int_to_ptr.hbm [resolvable:$true] %s383
          %s385 = sshll.u32 [#allocation7], 4
          %s386 = int_to_ptr.vmem [resolvable:$true] %s385
          %388 = dma.hbm_to_vmem [thread:$0]  %s384, 16, %s386, [#allocation6]
        $region20: #{tpu_custom_call.1} parent=11 // pred_fallthru
          _
        // Predicated region
        $region21: #{tpu_custom_call.1} parent=11 // pred_check
          %p389 = pneg %p144
        $region22: #{tpu_custom_call.1} parent=11 // pred_check_branch
          %391 = sbr.rel (%p389) target = $region24
        $region23: #{tpu_custom_call.1} parent=11 // pred_region
          _
        $region24: #{tpu_custom_call.1} parent=11 // pred_fallthru
          _
        // Predicated region
        $region25: #{tpu_custom_call.1} parent=11 // pred_check
          %p392 = pneg %p165
        $region26: #{tpu_custom_call.1} parent=11 // pred_check_branch
          %394 = sbr.rel (%p392) target = $region28
        $region27: #{tpu_custom_call.1} parent=11 // pred_region
          _
        $region28: #{tpu_custom_call.1} parent=11 // pred_fallthru
          _
        // Predicated region
        $region29: #{tpu_custom_call.1} parent=11 // pred_check
          %p395 = pneg %p186
        $region30: #{tpu_custom_call.1} parent=11 // pred_check_branch
          %397 = sbr.rel (%p395) target = $region32
        $region31: #{tpu_custom_call.1} parent=11 // pred_region
          _
        $region32: #{tpu_custom_call.1} parent=11 // pred_fallthru
          _
        // Predicated region
        $region33: #{tpu_custom_call.1} parent=11 // pred_check
          %p398 = pneg %p207
        $region34: #{tpu_custom_call.1} parent=11 // pred_check_branch
          %400 = sbr.rel (%p398) target = $region36
        $region35: #{tpu_custom_call.1} parent=11 // pred_region
          _
        $region36: #{tpu_custom_call.1} parent=11 // pred_fallthru
          _
        // Predicated region
        $region37: #{tpu_custom_call.1} parent=11 // pred_check
          %p401 = pneg %p228
        $region38: #{tpu_custom_call.1} parent=11 // pred_check_branch
          %403 = sbr.rel (%p401) target = $region40
        $region39: #{tpu_custom_call.1} parent=11 // pred_region
          _
        $region40: #{tpu_custom_call.1} parent=11 // pred_fallthru
          _
        // Predicated region
        $region41: #{tpu_custom_call.1} parent=11 // pred_check
          %p404 = pneg %p249
        $region42: #{tpu_custom_call.1} parent=11 // pred_check_branch
          %406 = sbr.rel (%p404) target = $region44
        $region43: #{tpu_custom_call.1} parent=11 // pred_region
          _
        $region44: #{tpu_custom_call.1} parent=11 // pred_fallthru
          _
        // Predicated region
        $region45: #{tpu_custom_call.1} parent=11 // pred_check
          %p407 = pneg %p270
        $region46: #{tpu_custom_call.1} parent=11 // pred_check_branch
          %409 = sbr.rel (%p407) target = $region48
        $region47: #{tpu_custom_call.1} parent=11 // pred_region
          _
        $region48: #{tpu_custom_call.1} parent=11 // pred_fallthru
          _
        // Predicated region
        $region49: #{tpu_custom_call.1} parent=11 // pred_check
          %p410 = pneg %p291
        $region50: #{tpu_custom_call.1} parent=11 // pred_check_branch
          %412 = sbr.rel (%p410) target = $region52
        $region51: #{tpu_custom_call.1} parent=11 // pred_region
          _
        $region52: #{tpu_custom_call.1} parent=11 // pred_fallthru
          _
        // Predicated region
        $region53: #{tpu_custom_call.1} parent=11 // pred_check
          %p413 = pneg %p312
        $region54: #{tpu_custom_call.1} parent=11 // pred_check_branch
          %415 = sbr.rel (%p413) target = $region56
        $region55: #{tpu_custom_call.1} parent=11 // pred_region
          _
        $region56: #{tpu_custom_call.1} parent=11 // pred_fallthru
          _
        // Predicated region
        $region57: #{tpu_custom_call.1} parent=11 // pred_check
          %p416 = pneg %p333
        $region58: #{tpu_custom_call.1} parent=11 // pred_check_branch
          %418 = sbr.rel (%p416) target = $region60
        $region59: #{tpu_custom_call.1} parent=11 // pred_region
          _
        $region60: #{tpu_custom_call.1} parent=11 // pred_fallthru
          _
      $region12: #{tpu_custom_call.1} parent=5 // pred_fallthru
        _
      %p419 = scmp.lt.s32.totalorder %s29, 2
      // Predicated region
      $region61: #{tpu_custom_call.1} parent=5 // pred_check
        %p420 = pneg %p419
      $region62: #{tpu_custom_call.1} parent=5 // pred_check_branch
        %422 = sbr.rel (%p420) target = $region64
      $region63: #{tpu_custom_call.1} parent=5 // pred_region
        // Predicated region
        $region65: #{tpu_custom_call.1} parent=63 // pred_check
          %p423 = pneg %p49
        $region66: #{tpu_custom_call.1} parent=63 // pred_check_branch
          %425 = sbr.rel (%p423) target = $region68
        $region67: #{tpu_custom_call.1} parent=63 // pred_region
          %s426 = sand.u32 %s39, 1
          %s427 = scalar_lea.sflag [#allocation3], %s426
          %s428 = sand.u32 %s39, 1
          %s429 = smul.addr %s428, 8
          %s430 = scalar_lea.vmem [#allocation2], %s429
          %432 = vsyncadd %s427, 0
          %s433 = smul.addr %s29, 8
          %s434 = scalar_lea.hbm %s0, %s433
          %s436 = sshll.u32 %s434, 4
          %s437 = int_to_ptr.hbm [resolvable:$true] %s436
          %s438 = sshll.u32 %s430, 4
          %s439 = int_to_ptr.vmem [resolvable:$true] %s438
          %441 = dma.hbm_to_vmem [thread:$0]  %s437, 128, %s439, %s427
        $region68: #{tpu_custom_call.1} parent=63 // pred_fallthru
          _
        // Predicated region
        $region69: #{tpu_custom_call.1} parent=63 // pred_check
          %p442 = pneg %p75
        $region70: #{tpu_custom_call.1} parent=63 // pred_check_branch
          %444 = sbr.rel (%p442) target = $region72
        $region71: #{tpu_custom_call.1} parent=63 // pred_region
          %s445 = sand.u32 %s29, 1
          %s446 = scalar_lea.sflag [#allocation6], %s445
          %s447 = sand.u32 %s65, 1
          %s448 = scalar_lea.vmem [#allocation5], %s447
          %450 = vsyncadd %s446, 0
          %s451 = scalar_lea.hbm %s1, %s29
          %s453 = sshll.u32 %s451, 4
          %s454 = int_to_ptr.hbm [resolvable:$true] %s453
          %s455 = sshll.u32 %s448, 4
          %s456 = int_to_ptr.vmem [resolvable:$true] %s455
          %458 = dma.hbm_to_vmem [thread:$0]  %s454, 16, %s456, %s446
        $region72: #{tpu_custom_call.1} parent=63 // pred_fallthru
          _
      $region64: #{tpu_custom_call.1} parent=5 // pred_fallthru
        _
      %p459 = scmp.le.s32.totalorder 1, %s29
      %p460 = scmp.lt.s32.totalorder %s29, 3
      %p461 = pnand %p459, %p460
      %p462 = pneg %p461
      // Predicated region
      $region73: #{tpu_custom_call.1} parent=5 // pred_check
        _
      $region74: #{tpu_custom_call.1} parent=5 // pred_check_branch
        %464 = sbr.rel (%p461) target = $region76
      $region75: #{tpu_custom_call.1} parent=5 // pred_region
        %s465 = ssub.s32 %s29, 1
        %s466 = sand.u32 %s42, 1
        %s467 = scalar_lea.sflag [#allocation3], %s466
        %s468 = sand.u32 %s42, 1
        %s469 = smul.addr %s468, 8
        %s470 = scalar_lea.vmem [#allocation2], %s469
        // Predicated region
        $region77: #{tpu_custom_call.1} parent=75 // pred_check
          %p471 = pneg %p55
        $region78: #{tpu_custom_call.1} parent=75 // pred_check_branch
          %473 = sbr.rel (%p471) target = $region80
        $region79: #{tpu_custom_call.1} parent=75 // pred_region
          %475 = dma.done %s467, 128
        $region80: #{tpu_custom_call.1} parent=75 // pred_fallthru
          _
        %s476 = sand.u32 %s34, 1
        %s477 = scalar_lea.sflag [#allocation6], %s476
        %s478 = sand.u32 %s68, 1
        %s479 = scalar_lea.vmem [#allocation5], %s478
        // Predicated region
        $region81: #{tpu_custom_call.1} parent=75 // pred_check
          %p480 = pneg %p81
        $region82: #{tpu_custom_call.1} parent=75 // pred_check_branch
          %482 = sbr.rel (%p480) target = $region84
        $region83: #{tpu_custom_call.1} parent=75 // pred_region
          %484 = dma.done %s477, 16
        $region84: #{tpu_custom_call.1} parent=75 // pred_fallthru
          _
        // Predicated region
        $region85: #{tpu_custom_call.1} parent=75 // pred_check
          %p485 = pneg %p123
        $region86: #{tpu_custom_call.1} parent=75 // pred_check_branch
          %487 = sbr.rel (%p485) target = $region88
        $region87: #{tpu_custom_call.1} parent=75 // pred_region
          %489 = dma.done [#allocation6], 16
        $region88: #{tpu_custom_call.1} parent=75 // pred_fallthru
          _
        %s490 = sand.u32 %s42, 1
        %s491 = scalar_lea.sflag [#allocation3], %s490
        %s492 = sand.u32 %s42, 1
        %s493 = smul.addr %s492, 8
        %s494 = scalar_lea.vmem [#allocation2], %s493
        %p495 = pneg %p55
        %p496 = pneg %p52
        %s497 = sand.u32 %s34, 1
        %s498 = scalar_lea.sflag [#allocation6], %s497
        %s499 = sand.u32 %s68, 1
        %s500 = scalar_lea.vmem [#allocation5], %s499
        %p501 = pneg %p81
        %p502 = pneg %p78
        %p503 = pneg %p102
        %p504 = pneg %p99
        %p505 = pneg %p123
        %p506 = pneg %p120
        %p507 = pneg %p144
        %p508 = pneg %p141
        %p509 = pneg %p165
        %p510 = pneg %p162
        %p511 = pneg %p186
        %p512 = pneg %p183
        %p513 = pneg %p207
        %p514 = pneg %p204
        %p515 = pneg %p228
        %p516 = pneg %p225
        %p517 = pneg %p249
        %p518 = pneg %p246
        %p519 = pneg %p270
        %p520 = pneg %p267
        %p521 = pneg %p291
        %p522 = pneg %p288
        %p523 = pneg %p312
        %p524 = pneg %p309
        %p525 = pneg %p333
        %p526 = pneg %p330
        %p527 = pneg %p359
        %p528 = pneg %p356
        %s529 = sand.u32 %s346, 1
        %s530 = scalar_lea.sflag [#allocation4], %s529
        %s531 = sand.u32 %s346, 1
        %s532 = smul.addr %s531, 8
        %s533 = scalar_lea.vmem [#allocation8], %s532
        %v534 = vld [vmem:[%s470] sm:$0xff]
        %v535 = vld [vmem:[%s479] sm:$0x1]
        %v536 = vld [vmem:[%s2] sm:$0x1]
        %v537 = vld [vmem:[#allocation7] sm:$0x1]
        %vm538 = vcmask 261120
        %v539 = vsel %vm538, %v534, 0.0
        %540 = vadd.xlane.f32.xlu0 %v539
        %v541 = vpop.xlane.xlu0 %540
        %v542 = vrcp.pop 32.0
        %v543 = vmul.f32 32.0, %v542
        %v544 = vsub.f32 1.0, %v543
        %v545 = vmul.f32 %v542, %v544
        %v546 = vadd.f32 %v542, %v545
        %vm547 = vweird.f32 %v542
        %v548 = vsel %vm547, %v542, %v546
        %v549 = vmul.f32 %v541, %v548
        %v550 = vsub.f32 %v534, %v549
        %v551 = vmul.f32 %v550, %v550
        %v552 = vsel %vm538, %v551, 0.0
        %553 = vadd.xlane.f32.xlu0 %v552
        %v554 = vpop.xlane.xlu0 %553
        %v555 = vmul.f32 %v554, %v548
        %v556 = vadd.f32 %v555, 1e-05
        %v557 = vrsqrt.pop %v556
        %v558 = vmul.f32 %v557, %v556
        %v559 = vmul.f32 %v558, %v557
        %v560 = vmul.f32 0.5, %v559
        %v561 = vsub.f32 1.5, %v560
        %v562 = vmul.f32 %v557, %v561
        %vm563 = vweird.f32 %v556
        %vm564 = vweird.f32 %v557
        %vm565 = vmor %vm563, %vm564
        %v566 = vsel %vm565, %v557, %v562
        %v567 = vmul.f32 %v550, %v566
        %v569 = vperm.slane %v536, 0
        %v571 = vmul.f32 %v567, %v569
        %v573 = vperm.slane %v537, 0
        %v575 = vadd.f32 %v571, %v573
        %v576 = vld [vmem:[%s4] sm:$0xff]
        %v577 = vld [vmem:[%s4 + $0x8] sm:$0xff]
        %v578 = vld [vmem:[%s4 + $0x10] sm:$0xff]
        %v579 = vld [vmem:[%s4 + $0x18] sm:$0xff]
        %v580 = vld [vmem:[%s5] sm:$0x1]
        %v582 = vperm.slane %v580, 0
        %v585 = vsel %vm538, %v575, 0
        %587 = vmatpush.msra.mxu0 0.0
        %588 = vmatpush.msra.mxu0 0.0
        %589 = vmatpush.msra.mxu0 0.0
        %590 = vmatpush.msra.mxu0 0.0
        %591 = vmatpush.msra.mxu0 0.0
        %592 = vmatpush.msra.mxu0 0.0
        %593 = vmatpush.msra.mxu0 0.0
        %594 = vmatpush.msra.mxu0 0.0
        %595 = vmatpush.msra.mxu0 0.0
        %596 = vmatpush.msra.mxu0 0.0
        %597 = vmatpush.msra.mxu0 0.0
        %598 = vmatpush.msra.mxu0 0.0
        %599 = vmatpush.msra.mxu0 %v579
        %600 = vmatpush.msra.mxu0 %v578
        %601 = vmatpush.msra.mxu0 %v577
        %602 = vmatpush.msra.mxu0 %v576
        %603 = vmatmul.f32.gmra.mxu0 %v585
        %v604 = vpop.f32.mrf.mxu0
        %v605 = vadd.f32 %v582, %v604
        %606 = vdwg.mxu0
        %608 = vrot.lane.b32.xlu0 %v605, 120
        %v609 = vpop.permute.xlu0 %608
        %610 = vrot.lane.b32.xlu0 %v605, 112
        %v611 = vpop.permute.xlu0 %610
        %612 = vrot.lane.b32.xlu0 %v605, 104
        %v613 = vpop.permute.xlu0 %612
        %vm614 = vcmp.eq.f32.partialorder %v535, 0.0
        %v615 = vsel %vm614, -1e+30, 0.0
        %v617 = vperm.slane %v615, 0
        %619 = vrot.lane.b32.xlu0 %v605, 96
        %v620 = vpop.permute.xlu0 %619
        %vm621 = vcmask 64512
        %v622 = vsel %vm621, %v605, 0
        %v624 = vsel %vm621, %v620, 0
        %626 = vmatpush.xpose.msra.mxu0 0.0
        %627 = vmatpush.xpose.msra.mxu0 0.0
        %628 = vmatpush.xpose.msra.mxu0 0.0
        %629 = vmatpush.xpose.msra.mxu0 0.0
        %630 = vmatpush.xpose.msra.mxu0 0.0
        %631 = vmatpush.xpose.msra.mxu0 0.0
        %632 = vmatpush.xpose.msra.mxu0 0.0
        %633 = vmatpush.xpose.msra.mxu0 0.0
        %634 = vmatpush.xpose.msra.mxu0 0.0
        %635 = vmatpush.xpose.msra.mxu0 0.0
        %636 = vmatpush.xpose.msra.mxu0 0.0
        %637 = vmatpush.xpose.msra.mxu0 0.0
        %638 = vmatpush.xpose.msra.mxu0 0.0
        %639 = vmatpush.xpose.msra.mxu0 0.0
        %640 = vmatpush.xpose.msra.mxu0 0.0
        %641 = vmatpush.xpose.msra.mxu0 %v624
        %642 = vmatmul.f32.gmra.mxu0 %v622
        %v643 = vpop.f32.mrf.mxu0
        %v644 = vadd.f32 %v617, %v643
        %645 = vdwg.mxu0
        %646 = vrot.lane.b32.xlu0 %v609, 96
        %v647 = vpop.permute.xlu0 %646
        %v648 = vsel %vm621, %v609, 0
        %v650 = vsel %vm621, %v647, 0
        %652 = vmatpush.xpose.msra.mxu0 0.0
        %653 = vmatpush.xpose.msra.mxu0 0.0
        %654 = vmatpush.xpose.msra.mxu0 0.0
        %655 = vmatpush.xpose.msra.mxu0 0.0
        %656 = vmatpush.xpose.msra.mxu0 0.0
        %657 = vmatpush.xpose.msra.mxu0 0.0
        %658 = vmatpush.xpose.msra.mxu0 0.0
        %659 = vmatpush.xpose.msra.mxu0 0.0
        %660 = vmatpush.xpose.msra.mxu0 0.0
        %661 = vmatpush.xpose.msra.mxu0 0.0
        %662 = vmatpush.xpose.msra.mxu0 0.0
        %663 = vmatpush.xpose.msra.mxu0 0.0
        %664 = vmatpush.xpose.msra.mxu0 0.0
        %665 = vmatpush.xpose.msra.mxu0 0.0
        %666 = vmatpush.xpose.msra.mxu0 0.0
        %667 = vmatpush.xpose.msra.mxu0 %v650
        %668 = vmatmul.f32.gmra.mxu0 %v648
        %v669 = vpop.f32.mrf.mxu0
        %v670 = vadd.f32 %v617, %v669
        %671 = vdwg.mxu0
        %672 = vrot.lane.b32.xlu0 %v611, 96
        %v673 = vpop.permute.xlu0 %672
        %v674 = vsel %vm621, %v611, 0
        %v676 = vsel %vm621, %v673, 0
        %678 = vmatpush.xpose.msra.mxu0 0.0
        %679 = vmatpush.xpose.msra.mxu0 0.0
        %680 = vmatpush.xpose.msra.mxu0 0.0
        %681 = vmatpush.xpose.msra.mxu0 0.0
        %682 = vmatpush.xpose.msra.mxu0 0.0
        %683 = vmatpush.xpose.msra.mxu0 0.0
        %684 = vmatpush.xpose.msra.mxu0 0.0
        %685 = vmatpush.xpose.msra.mxu0 0.0
        %686 = vmatpush.xpose.msra.mxu0 0.0
        %687 = vmatpush.xpose.msra.mxu0 0.0
        %688 = vmatpush.xpose.msra.mxu0 0.0
        %689 = vmatpush.xpose.msra.mxu0 0.0
        %690 = vmatpush.xpose.msra.mxu0 0.0
        %691 = vmatpush.xpose.msra.mxu0 0.0
        %692 = vmatpush.xpose.msra.mxu0 0.0
        %693 = vmatpush.xpose.msra.mxu0 %v676
        %694 = vmatmul.f32.gmra.mxu0 %v674
        %v695 = vpop.f32.mrf.mxu0
        %v696 = vadd.f32 %v617, %v695
        %697 = vdwg.mxu0
        %698 = vrot.lane.b32.xlu0 %v613, 96
        %v699 = vpop.permute.xlu0 %698
        %v700 = vsel %vm621, %v613, 0
        %v702 = vsel %vm621, %v699, 0
        %704 = vmatpush.xpose.msra.mxu0 0.0
        %705 = vmatpush.xpose.msra.mxu0 0.0
        %706 = vmatpush.xpose.msra.mxu0 0.0
        %707 = vmatpush.xpose.msra.mxu0 0.0
        %708 = vmatpush.xpose.msra.mxu0 0.0
        %709 = vmatpush.xpose.msra.mxu0 0.0
        %710 = vmatpush.xpose.msra.mxu0 0.0
        %711 = vmatpush.xpose.msra.mxu0 0.0
        %712 = vmatpush.xpose.msra.mxu0 0.0
        %713 = vmatpush.xpose.msra.mxu0 0.0
        %714 = vmatpush.xpose.msra.mxu0 0.0
        %715 = vmatpush.xpose.msra.mxu0 0.0
        %716 = vmatpush.xpose.msra.mxu0 0.0
        %717 = vmatpush.xpose.msra.mxu0 0.0
        %718 = vmatpush.xpose.msra.mxu0 0.0
        %719 = vmatpush.xpose.msra.mxu0 %v702
        %720 = vmatmul.f32.gmra.mxu0 %v700
        %v721 = vpop.f32.mrf.mxu0
        %v722 = vadd.f32 %v617, %v721
        %723 = vdwg.mxu0
        %v724 = vsel %vm621, %v644, -inf
        %725 = vmax.xlane.f32.xlu0 %v724
        %v726 = vpop.xlane.xlu0 %725
        %v727 = vsel %vm621, %v670, -inf
        %728 = vmax.xlane.f32.xlu0 %v727
        %v729 = vpop.xlane.xlu0 %728
        %v730 = vsel %vm621, %v696, -inf
        %731 = vmax.xlane.f32.xlu0 %v730
        %v732 = vpop.xlane.xlu0 %731
        %v733 = vsel %vm621, %v722, -inf
        %734 = vmax.xlane.f32.xlu0 %v733
        %v735 = vpop.xlane.xlu0 %734
        %v736 = vsub.f32 %v644, %v726
        %v737 = vsub.f32 %v670, %v729
        %v738 = vsub.f32 %v696, %v732
        %v739 = vsub.f32 %v722, %v735
        %v740 = vmul.f32 %v736, 1.442695
        %v741 = vpow.pop %v740
        %v742 = vmul.f32 %v737, 1.442695
        %v743 = vpow.pop %v742
        %v744 = vmul.f32 %v738, 1.442695
        %v745 = vpow.pop %v744
        %v746 = vmul.f32 %v739, 1.442695
        %v747 = vpow.pop %v746
        %v748 = vsel %vm621, %v741, 0.0
        %749 = vadd.xlane.f32.xlu0 %v748
        %v750 = vpop.xlane.xlu0 %749
        %v751 = vsel %vm621, %v743, 0.0
        %752 = vadd.xlane.f32.xlu0 %v751
        %v753 = vpop.xlane.xlu0 %752
        %v754 = vsel %vm621, %v745, 0.0
        %755 = vadd.xlane.f32.xlu0 %v754
        %v756 = vpop.xlane.xlu0 %755
        %v757 = vsel %vm621, %v747, 0.0
        %758 = vadd.xlane.f32.xlu0 %v757
        %v759 = vpop.xlane.xlu0 %758
        %v760 = vrcp.pop %v750
        %v761 = vmul.f32 %v750, %v760
        %v762 = vsub.f32 1.0, %v761
        %v763 = vmul.f32 %v760, %v762
        %v764 = vadd.f32 %v760, %v763
        %vm765 = vweird.f32 %v750
        %vm766 = vweird.f32 %v760
        %vm767 = vmor %vm765, %vm766
        %v768 = vsel %vm767, %v760, %v764
        %v769 = vand.u32 2147483647, %v750
        %vm770 = vcmp.eq.f32.partialorder %v769, 8.507059e+37
        %v771 = vand.u32 %v750, 2147483648
        %v772 = vor.u32 1.1754944e-38, %v771
        %v773 = vsel %vm770, %v772, %v768
        %v774 = vrcp.pop %v753
        %v775 = vmul.f32 %v753, %v774
        %v776 = vsub.f32 1.0, %v775
        %v777 = vmul.f32 %v774, %v776
        %v778 = vadd.f32 %v774, %v777
        %vm779 = vweird.f32 %v753
        %vm780 = vweird.f32 %v774
        %vm781 = vmor %vm779, %vm780
        %v782 = vsel %vm781, %v774, %v778
        %v783 = vand.u32 2147483647, %v753
        %vm784 = vcmp.eq.f32.partialorder %v783, 8.507059e+37
        %v785 = vand.u32 %v753, 2147483648
        %v786 = vor.u32 1.1754944e-38, %v785
        %v787 = vsel %vm784, %v786, %v782
        %v788 = vrcp.pop %v756
        %v789 = vmul.f32 %v756, %v788
        %v790 = vsub.f32 1.0, %v789
        %v791 = vmul.f32 %v788, %v790
        %v792 = vadd.f32 %v788, %v791
        %vm793 = vweird.f32 %v756
        %vm794 = vweird.f32 %v788
        %vm795 = vmor %vm793, %vm794
        %v796 = vsel %vm795, %v788, %v792
        %v797 = vand.u32 2147483647, %v756
        %vm798 = vcmp.eq.f32.partialorder %v797, 8.507059e+37
        %v799 = vand.u32 %v756, 2147483648
        %v800 = vor.u32 1.1754944e-38, %v799
        %v801 = vsel %vm798, %v800, %v796
        %v802 = vrcp.pop %v759
        %v803 = vmul.f32 %v759, %v802
        %v804 = vsub.f32 1.0, %v803
        %v805 = vmul.f32 %v802, %v804
        %v806 = vadd.f32 %v802, %v805
        %vm807 = vweird.f32 %v759
        %vm808 = vweird.f32 %v802
        %vm809 = vmor %vm807, %vm808
        %v810 = vsel %vm809, %v802, %v806
        %v811 = vand.u32 2147483647, %v759
        %vm812 = vcmp.eq.f32.partialorder %v811, 8.507059e+37
        %v813 = vand.u32 %v759, 2147483648
        %v814 = vor.u32 1.1754944e-38, %v813
        %v815 = vsel %vm812, %v814, %v810
        %v816 = vmul.f32 %v741, %v773
        %v817 = vmul.f32 %v743, %v787
        %v818 = vmul.f32 %v745, %v801
        %v819 = vmul.f32 %v747, %v815
        %820 = vrot.lane.b32.xlu0 %v605, 64
        %v821 = vpop.permute.xlu0 %820
        %v824 = vsel %vm621, %v816, 0
        %826 = vmatpush.msra.mxu0 0.0
        %827 = vmatpush.msra.mxu0 0.0
        %828 = vmatpush.msra.mxu0 0.0
        %829 = vmatpush.msra.mxu0 0.0
        %830 = vmatpush.msra.mxu0 0.0
        %831 = vmatpush.msra.mxu0 0.0
        %832 = vmatpush.msra.mxu0 0.0
        %833 = vmatpush.msra.mxu0 0.0
        %834 = vmatpush.msra.mxu0 0.0
        %835 = vmatpush.msra.mxu0 0.0
        %836 = vmatpush.msra.mxu0 0.0
        %837 = vmatpush.msra.mxu0 0.0
        %838 = vmatpush.msra.mxu0 0.0
        %839 = vmatpush.msra.mxu0 0.0
        %840 = vmatpush.msra.mxu0 0.0
        %841 = vmatpush.msra.mxu0 %v821
        %842 = vmatmul.f32.gmra.mxu0 %v824
        %v843 = vpop.f32.mrf.mxu0
        %v844 = vadd.f32 0.0, %v843
        %845 = vdwg.mxu0
        %846 = vrot.lane.b32.xlu0 %v609, 64
        %v847 = vpop.permute.xlu0 %846
        %v850 = vsel %vm621, %v817, 0
        %852 = vmatpush.msra.mxu0 0.0
        %853 = vmatpush.msra.mxu0 0.0
        %854 = vmatpush.msra.mxu0 0.0
        %855 = vmatpush.msra.mxu0 0.0
        %856 = vmatpush.msra.mxu0 0.0
        %857 = vmatpush.msra.mxu0 0.0
        %858 = vmatpush.msra.mxu0 0.0
        %859 = vmatpush.msra.mxu0 0.0
        %860 = vmatpush.msra.mxu0 0.0
        %861 = vmatpush.msra.mxu0 0.0
        %862 = vmatpush.msra.mxu0 0.0
        %863 = vmatpush.msra.mxu0 0.0
        %864 = vmatpush.msra.mxu0 0.0
        %865 = vmatpush.msra.mxu0 0.0
        %866 = vmatpush.msra.mxu0 0.0
        %867 = vmatpush.msra.mxu0 %v847
        %868 = vmatmul.f32.gmra.mxu0 %v850
        %v869 = vpop.f32.mrf.mxu0
        %v870 = vadd.f32 0.0, %v869
        %871 = vdwg.mxu0
        %872 = vrot.lane.b32.xlu0 %v611, 64
        %v873 = vpop.permute.xlu0 %872
        %v876 = vsel %vm621, %v818, 0
        %878 = vmatpush.msra.mxu0 0.0
        %879 = vmatpush.msra.mxu0 0.0
        %880 = vmatpush.msra.mxu0 0.0
        %881 = vmatpush.msra.mxu0 0.0
        %882 = vmatpush.msra.mxu0 0.0
        %883 = vmatpush.msra.mxu0 0.0
        %884 = vmatpush.msra.mxu0 0.0
        %885 = vmatpush.msra.mxu0 0.0
        %886 = vmatpush.msra.mxu0 0.0
        %887 = vmatpush.msra.mxu0 0.0
        %888 = vmatpush.msra.mxu0 0.0
        %889 = vmatpush.msra.mxu0 0.0
        %890 = vmatpush.msra.mxu0 0.0
        %891 = vmatpush.msra.mxu0 0.0
        %892 = vmatpush.msra.mxu0 0.0
        %893 = vmatpush.msra.mxu0 %v873
        %894 = vmatmul.f32.gmra.mxu0 %v876
        %v895 = vpop.f32.mrf.mxu0
        %v896 = vadd.f32 0.0, %v895
        %897 = vdwg.mxu0
        %898 = vrot.lane.b32.xlu0 %v613, 64
        %v899 = vpop.permute.xlu0 %898
        %v902 = vsel %vm621, %v819, 0
        %904 = vmatpush.msra.mxu0 0.0
        %905 = vmatpush.msra.mxu0 0.0
        %906 = vmatpush.msra.mxu0 0.0
        %907 = vmatpush.msra.mxu0 0.0
        %908 = vmatpush.msra.mxu0 0.0
        %909 = vmatpush.msra.mxu0 0.0
        %910 = vmatpush.msra.mxu0 0.0
        %911 = vmatpush.msra.mxu0 0.0
        %912 = vmatpush.msra.mxu0 0.0
        %913 = vmatpush.msra.mxu0 0.0
        %914 = vmatpush.msra.mxu0 0.0
        %915 = vmatpush.msra.mxu0 0.0
        %916 = vmatpush.msra.mxu0 0.0
        %917 = vmatpush.msra.mxu0 0.0
        %918 = vmatpush.msra.mxu0 0.0
        %919 = vmatpush.msra.mxu0 %v899
        %920 = vmatmul.f32.gmra.mxu0 %v902
        %v921 = vpop.f32.mrf.mxu0
        %v922 = vadd.f32 0.0, %v921
        %923 = vdwg.mxu0
        %925 = vrot.lane.b32.xlu0 %v870, 8
        %v926 = vpop.permute.xlu0 %925
        %929 = vrot.lane.b32.xlu0 %v896, 16
        %v930 = vpop.permute.xlu0 %929
        %933 = vrot.lane.b32.xlu0 %v922, 24
        %v934 = vpop.permute.xlu0 %933
        %v936 = vsel %vm621, %v844, %v926
        %vm937 = vcmask 130048
        %v938 = vsel %vm937, %v936, %v930
        %vm939 = vcmask 195584
        %v940 = vsel %vm939, %v938, %v934
        %v941 = vld [vmem:[%s6] sm:$0xff]
        %v942 = vld [vmem:[%s6 + $0x8] sm:$0xff]
        %v943 = vld [vmem:[%s6 + $0x10] sm:$0xff]
        %v944 = vld [vmem:[%s6 + $0x18] sm:$0xff]
        %v945 = vld [vmem:[%s7] sm:$0x1]
        %v947 = vperm.slane %v945, 0
        %v950 = vsel %vm538, %v940, 0
        %952 = vmatpush.msra.mxu0 0.0
        %953 = vmatpush.msra.mxu0 0.0
        %954 = vmatpush.msra.mxu0 0.0
        %955 = vmatpush.msra.mxu0 0.0
        %956 = vmatpush.msra.mxu0 0.0
        %957 = vmatpush.msra.mxu0 0.0
        %958 = vmatpush.msra.mxu0 0.0
        %959 = vmatpush.msra.mxu0 0.0
        %960 = vmatpush.msra.mxu0 0.0
        %961 = vmatpush.msra.mxu0 0.0
        %962 = vmatpush.msra.mxu0 0.0
        %963 = vmatpush.msra.mxu0 0.0
        %964 = vmatpush.msra.mxu0 %v944
        %965 = vmatpush.msra.mxu0 %v943
        %966 = vmatpush.msra.mxu0 %v942
        %967 = vmatpush.msra.mxu0 %v941
        %968 = vmatmul.f32.gmra.mxu0 %v950
        %v969 = vpop.f32.mrf.mxu0
        %v970 = vadd.f32 %v947, %v969
        %971 = vdwg.mxu0
        %v972 = vadd.f32 %v970, %v534
        %v973 = vld [vmem:[%s8] sm:$0x1]
        %v974 = vld [vmem:[%s9] sm:$0x1]
        %v975 = vsel %vm538, %v972, 0.0
        %976 = vadd.xlane.f32.xlu0 %v975
        %v977 = vpop.xlane.xlu0 %976
        %v978 = vmul.f32 %v977, %v548
        %v979 = vsub.f32 %v972, %v978
        %v980 = vmul.f32 %v979, %v979
        %v981 = vsel %vm538, %v980, 0.0
        %982 = vadd.xlane.f32.xlu0 %v981
        %v983 = vpop.xlane.xlu0 %982
        %v984 = vmul.f32 %v983, %v548
        %v985 = vadd.f32 %v984, 1e-05
        %v986 = vrsqrt.pop %v985
        %v987 = vmul.f32 %v986, %v985
        %v988 = vmul.f32 %v987, %v986
        %v989 = vmul.f32 0.5, %v988
        %v990 = vsub.f32 1.5, %v989
        %v991 = vmul.f32 %v986, %v990
        %vm992 = vweird.f32 %v985
        %vm993 = vweird.f32 %v986
        %vm994 = vmor %vm992, %vm993
        %v995 = vsel %vm994, %v986, %v991
        %v996 = vmul.f32 %v979, %v995
        %v998 = vperm.slane %v973, 0
        %v1000 = vmul.f32 %v996, %v998
        %v1002 = vperm.slane %v974, 0
        %v1004 = vadd.f32 %v1000, %v1002
        %v1005 = vld [vmem:[%s10] sm:$0xff]
        %v1006 = vld [vmem:[%s10 + $0x8] sm:$0xff]
        %v1007 = vld [vmem:[%s10 + $0x10] sm:$0xff]
        %v1008 = vld [vmem:[%s10 + $0x18] sm:$0xff]
        %v1009 = vld [vmem:[%s11] sm:$0x1]
        %v1011 = vperm.slane %v1009, 0
        %v1014 = vsel %vm538, %v1004, 0
        %1016 = vmatpush.msra.mxu0 0.0
        %1017 = vmatpush.msra.mxu0 0.0
        %1018 = vmatpush.msra.mxu0 0.0
        %1019 = vmatpush.msra.mxu0 0.0
        %1020 = vmatpush.msra.mxu0 0.0
        %1021 = vmatpush.msra.mxu0 0.0
        %1022 = vmatpush.msra.mxu0 0.0
        %1023 = vmatpush.msra.mxu0 0.0
        %1024 = vmatpush.msra.mxu0 0.0
        %1025 = vmatpush.msra.mxu0 0.0
        %1026 = vmatpush.msra.mxu0 0.0
        %1027 = vmatpush.msra.mxu0 0.0
        %1028 = vmatpush.msra.mxu0 %v1008
        %1029 = vmatpush.msra.mxu0 %v1007
        %1030 = vmatpush.msra.mxu0 %v1006
        %1031 = vmatpush.msra.mxu0 %v1005
        %1032 = vmatmul.f32.gmra.mxu0 %v1014
        %v1033 = vpop.f32.mrf.mxu0
        %v1034 = vadd.f32 %v1011, %v1033
        %1035 = vdwg.mxu0
        %v1036 = vmul.f32 %v1034, 0.5
        %v1037 = vmul.f32 %v1034, 0.70710677
        %v1038 = vmul.f32 %v1037, %v1037
        %v1039 = vmin.f32 16.0, %v1038
        %v1040 = vmul.f32 %v1039, 2.1237322e-06
        %v1041 = vadd.f32 %v1040, 0.00028619796
        %v1042 = vmul.f32 %v1039, %v1041
        %v1043 = vadd.f32 %v1042, 0.0036580483
        %v1044 = vmul.f32 %v1039, %v1043
        %v1045 = vadd.f32 %v1044, 0.05243302
        %v1046 = vmul.f32 %v1039, %v1045
        %v1047 = vadd.f32 %v1046, 0.18741608
        %v1048 = vmul.f32 %v1039, %v1047
        %v1049 = vadd.f32 %v1048, 1.1283791
        %v1050 = vmul.f32 %v1037, %v1049
        %v1051 = vmul.f32 %v1039, 3.8918573e-05
        %v1052 = vadd.f32 %v1051, 0.001143296
        %v1053 = vmul.f32 %v1039, %v1052
        %v1054 = vadd.f32 %v1053, 0.014752088
        %v1055 = vmul.f32 %v1039, %v1054
        %v1056 = vadd.f32 %v1055, 0.112945676
        %v1057 = vmul.f32 %v1039, %v1056
        %v1058 = vadd.f32 %v1057, 0.4994258
        %v1059 = vmul.f32 %v1039, %v1058
        %v1060 = vadd.f32 %v1059, 1.0
        %v1061 = vrcp.pop %v1060
        %v1062 = vmul.f32 %v1060, %v1061
        %v1063 = vsub.f32 1.0, %v1062
        %v1064 = vmul.f32 %v1061, %v1063
        %v1065 = vadd.f32 %v1061, %v1064
        %vm1066 = vweird.f32 %v1060
        %vm1067 = vweird.f32 %v1061
        %vm1068 = vmor %vm1066, %vm1067
        %v1069 = vsel %vm1068, %v1061, %v1065
        %v1070 = vand.u32 2147483647, %v1060
        %vm1071 = vcmp.eq.f32.partialorder %v1070, 8.507059e+37
        %v1072 = vand.u32 %v1060, 2147483648
        %v1073 = vor.u32 1.1754944e-38, %v1072
        %v1074 = vsel %vm1071, %v1073, %v1069
        %v1075 = vmul.f32 %v1050, %v1074
        %v1076 = vmin.f32 %v1075, 1.0
        %v1077 = vmax.f32 %v1076, -1.0
        %v1078 = vadd.f32 %v1077, 1.0
        %v1079 = vmul.f32 %v1036, %v1078
        %v1080 = vld [vmem:[%s12] sm:$0xff]
        %v1081 = vld [vmem:[%s12 + $0x8] sm:$0xff]
        %v1082 = vld [vmem:[%s12 + $0x10] sm:$0xff]
        %v1083 = vld [vmem:[%s12 + $0x18] sm:$0xff]
        %v1084 = vld [vmem:[%s12 + $0x20] sm:$0xff]
        %v1085 = vld [vmem:[%s12 + $0x28] sm:$0xff]
        %v1086 = vld [vmem:[%s12 + $0x30] sm:$0xff]
        %v1087 = vld [vmem:[%s12 + $0x38] sm:$0xff]
        %v1088 = vld [vmem:[%s13] sm:$0x1]
        %v1090 = vperm.slane %v1088, 0
        %vm1092 = vcmask 523264
        %v1094 = vsel %vm1092, %v1079, 0
        %1096 = vmatpush.msra.mxu0 0.0
        %1097 = vmatpush.msra.mxu0 0.0
        %1098 = vmatpush.msra.mxu0 0.0
        %1099 = vmatpush.msra.mxu0 0.0
        %1100 = vmatpush.msra.mxu0 0.0
        %1101 = vmatpush.msra.mxu0 0.0
        %1102 = vmatpush.msra.mxu0 0.0
        %1103 = vmatpush.msra.mxu0 0.0
        %1104 = vmatpush.msra.mxu0 %v1087
        %1105 = vmatpush.msra.mxu0 %v1086
        %1106 = vmatpush.msra.mxu0 %v1085
        %1107 = vmatpush.msra.mxu0 %v1084
        %1108 = vmatpush.msra.mxu0 %v1083
        %1109 = vmatpush.msra.mxu0 %v1082
        %1110 = vmatpush.msra.mxu0 %v1081
        %1111 = vmatpush.msra.mxu0 %v1080
        %1112 = vmatmul.f32.gmra.mxu0 %v1094
        %v1113 = vpop.f32.mrf.mxu0
        %v1114 = vadd.f32 %v1090, %v1113
        %1115 = vdwg.mxu0
        %v1116 = vadd.f32 %v1114, %v972
        %1117 = vst.msk [vmem:[%s533] sm:$0xff] %vm538, %v1116
        %s1118 = sand.u32 %s346, 1
        %s1119 = scalar_lea.sflag [#allocation4], %s1118
        %s1120 = sand.u32 %s346, 1
        %s1121 = smul.addr %s1120, 8
        %s1122 = scalar_lea.vmem [#allocation8], %s1121
        // Predicated region
        $region89: #{tpu_custom_call.1} parent=75 // pred_check
          %p1123 = pneg %p356
        $region90: #{tpu_custom_call.1} parent=75 // pred_check_branch
          %1125 = sbr.rel (%p1123) target = $region92
        $region91: #{tpu_custom_call.1} parent=75 // pred_region
          %1127 = vsyncadd %s1119, 0
          %s1128 = smul.addr %s34, 8
          %s1129 = scalar_lea.hbm %s14, %s1128
          %s1131 = sshll.u32 %s1122, 4
          %s1132 = int_to_ptr.vmem [resolvable:$true] %s1131
          %s1133 = sshll.u32 %s1129, 4
          %s1134 = int_to_ptr.hbm [resolvable:$true] %s1133
          %1136 = dma.vmem_to_hbm [thread:$0]  %s1132, 128, %s1134, %s1119
        $region92: #{tpu_custom_call.1} parent=75 // pred_fallthru
          _
      $region76: #{tpu_custom_call.1} parent=5 // pred_fallthru
        _
      %p1137 = scmp.le.s32.totalorder 2, %s29
      // Predicated region
      $region93: #{tpu_custom_call.1} parent=5 // pred_check
        %p1138 = pneg %p1137
      $region94: #{tpu_custom_call.1} parent=5 // pred_check_branch
        %1140 = sbr.rel (%p1138) target = $region96
      $region95: #{tpu_custom_call.1} parent=5 // pred_region
        %s1141 = ssub.s32 %s29, 2
        // Predicated region
        $region97: #{tpu_custom_call.1} parent=95 // pred_check
          %p1142 = pneg %p362
        $region98: #{tpu_custom_call.1} parent=95 // pred_check_branch
          %1144 = sbr.rel (%p1142) target = $region100
        $region99: #{tpu_custom_call.1} parent=95 // pred_region
          %s1145 = sand.u32 %s347, 1
          %s1146 = scalar_lea.sflag [#allocation4], %s1145
          %s1147 = sand.u32 %s347, 1
          %s1148 = smul.addr %s1147, 8
          %s1149 = scalar_lea.vmem [#allocation8], %s1148
          %1151 = dma.done %s1146, 128
        $region100: #{tpu_custom_call.1} parent=95 // pred_fallthru
          _
      $region96: #{tpu_custom_call.1} parent=5 // pred_fallthru
        _
    $region6: #{tpu_custom_call.1} parent=1 // loop_footer
      %s33 = sadd.s32 1, %s29
    $region7: #{tpu_custom_call.1} parent=1 // loop_footer_branch
      %28 = sbr.rel target = $region3
    $region8: #{tpu_custom_call.1} parent=1 // loop_exit
      _
    %1152 = vsyncpa [#allocation3], 1
    %s1153 = scalar_lea.sflag [#allocation3], 1
    %1154 = vsyncpa %s1153, 1
    %1155 = vsyncpa [#allocation6], 1
    %s1156 = scalar_lea.sflag [#allocation6], 1
    %1157 = vsyncpa %s1156, 1
    %1158 = vsyncpa [#allocation4], 1
    %s1159 = scalar_lea.sflag [#allocation4], 1
    %1160 = vsyncpa %s1159, 1

</llo_original>
